<compile_context>
chip_gen: v5e
topology: v5e:2x2
jax: 0.10.0
libtpu: 0.0.40
codegen_flags: <defaults>
</compile_context>

<pallas_src>
import numpy as np
import jax
import jax.numpy as jnp
from jax.experimental import pallas as pl
from jax.experimental.pallas import tpu as pltpu

INF = 10000.0      # matches `inf` in the reference implementation
NEG_BIG = -1e9     # padding sentinel: keeps padded tags out of every max/argmax
LANE = 128


# ---------------------------------------------------------------------------
# Synthetic automaton construction.  This mirrors make_state_labeled_automaton
# and the data structures built in PatCRF.__init__, hand-rolled (no `at` lib):
# two small complete pattern DFAs over alphabet {B, I, O}, product automaton
# with per-state pattern labels, then tags / constraints / tag2label / etc.
# ---------------------------------------------------------------------------
def build_patcrf_tables(seed=0):
    alphabet = ['B', 'I', 'O']
    # pattern 0: current prefix ends with 'B'
    p0 = ({0: {'B': 1, 'I': 0, 'O': 0},
           1: {'B': 1, 'I': 0, 'O': 0}}, {1})
    # pattern 1: current prefix ends with 'BI'
    p1 = ({0: {'B': 1, 'I': 0, 'O': 0},
           1: {'B': 1, 'I': 2, 'O': 0},
           2: {'B': 1, 'I': 0, 'O': 0}}, {2})
    patterns = [p0, p1]

    # product construction with state labels = set of currently-accepting patterns
    tuple2state = {(0, 0): 0}
    state2tuple = {0: (0, 0)}
    transitions = {0: {}}
    state_labels = {0: None}
    frontier = {0}
    while frontier:
        new_frontier = set()
        for s in sorted(frontier):
            for sym in alphabet:
                src = state2tuple[s]
                tgt = tuple(pt[st][sym] for (pt, _), st in zip(patterns, src))
                if tgt in tuple2state:
                    t = tuple2state[tgt]
                else:
                    t = len(tuple2state)
                    tuple2state[tgt] = t
                    state2tuple[t] = tgt
                    transitions[t] = {}
                    state_labels[t] = None
                    new_frontier.add(t)
                transitions[s][sym] = {t}
                lbl = set()
                for i, ((_, acc), st) in enumerate(zip(patterns, tgt)):
                    if st in acc:
                        lbl.add(i)
                state_labels[t] = lbl
        frontier = new_frontier
    n_states = len(tuple2state)

    # tags = (token, successor_state)
    tags = set()
    start_tag_pairs = set()
    for i in range(n_states):
        for tok, succs in transitions[i].items():
            for succ in succs:
                tags.add((tok, succ))
                if i == 0:
                    start_tag_pairs.add((tok, succ))
    tags = sorted(tags)
    n_tags = len(tags)
    labels = sorted(alphabet)
    n_labels = len(labels)
    n_patterns = len(patterns)
    start_tags = sorted(tags.index(st) for st in start_tag_pairs)

    tag2label = np.array([labels.index(t[0]) for t in tags], dtype=np.int32)
    tag_patterns = np.zeros((n_tags, n_patterns), dtype=np.float32)
    transition_constraints = np.zeros((n_tags, n_tags), dtype=np.float32)
    for i, (tok1, s1) in enumerate(tags):
        if state_labels[s1] is not None:
            for pid in state_labels[s1]:
                tag_patterns[i, pid] = 1.0
        for j, (tok2, s2) in enumerate(tags):
            if s2 not in transitions[s1][tok2]:
                transition_constraints[i, j] = -INF

    # label_transitions parameter: 0.1 * randn(n_labels, n_labels), deterministic
    key = jax.random.PRNGKey(seed)
    label_transitions = np.asarray(
        0.1 * jax.random.normal(key, (n_labels, n_labels), dtype=jnp.float32),
        dtype=np.float32)

    # _transitions(): label_transitions[tag2label[i], tag2label[j]] + constraints
    trans = (label_transitions[tag2label[:, None], tag2label[None, :]]
             + transition_constraints).astype(np.float32)

    return dict(n_tags=n_tags, n_labels=n_labels, n_patterns=n_patterns,
                tag2label=tag2label, tag_patterns=tag_patterns,
                start_tags=start_tags, transitions=trans)


# ---------------------------------------------------------------------------
# Pallas kernel: fused emission combine (one MXU pass), Viterbi forward
# recursion over a small (NT_S x 128) transition tile, and in-kernel traceback.
# Each grid step handles BB batch elements (statically unrolled).
# ---------------------------------------------------------------------------
def patcrf_kernel(em_ref, w_ref, trans_ref, transT_ref, eye_ref, start_ref,
                  seq_ref):
    # em_ref     : (BB, T, 128)  packed emissions: lanes [0,nL)=label, [nL,nL+nP)=pattern
    # w_ref      : (128, 128)    combined gather/pattern matrix, x = em @ W
    # trans_ref  : (NT_S, 128)   transitions[prev, cur]; padded rows/cols = NEG_BIG
    # transT_ref : (128, 128)    transitions transposed [cur, prev]; pads = NEG_BIG
    # eye_ref    : (NT_S, 128)   eye[p, p] = 1 (p < n_tags), used for lane->sublane move
    # start_ref  : (1, 128)      start-tag mask
    # seq_ref    : (BB, T)       output: MAP tag sequence (int32)
    BB, T, _ = em_ref.shape
    NT_S = trans_ref.shape[0]

    w = w_ref[...]
    trans = trans_ref[...]
    transT = transT_ref[...]
    eye = eye_ref[...]
    start = start_ref[...]
    lane_iota = jax.lax.broadcasted_iota(jnp.int32, (1, LANE), 1)

    def first_argmax(row):
        # first (lowest-index) argmax over lanes of a (1, 128) row -> (1, 1) int32
        m = jnp.max(row, axis=1, keepdims=True)
        return jnp.min(jnp.where(row == m, lane_iota, LANE),
                       axis=1, keepdims=True)

    # TODO(synk): for long sequences the unrolled Python loops over T should
    # become lax.fori_loop with the per-step rows held in a VMEM scratch.
    for b in range(BB):                       # static unroll over the batch block
        # x[t, tag] = label_em[t, tag2label[tag]] + pattern_em[t, :] @ tag_patterns[tag, :]
        x = jnp.dot(em_ref[b], w, preferred_element_type=jnp.float32)   # (T, 128)

        # --- Viterbi forward recursion -----------------------------------
        cur = jnp.where(start > 0.5, x[0:1, :], -INF)                   # (1, 128)
        rows = [cur]
        for i in range(1, T):
            # lane -> sublane move of the tiny state vector: masked mul + lane reduce
            prev_col = jnp.sum(eye * cur, axis=1, keepdims=True)        # (NT_S, 1)
            cur = (jnp.max(trans + prev_col, axis=0, keepdims=True)
                   + x[i:i + 1, :])                                     # (1, 128)
            rows.append(cur)

        # --- in-kernel traceback -----------------------------------------
        # tag[i] = argmax_p (logits[i, p] + transitions[p, tag[i+1]]); the
        # emission term is constant in p, so this reproduces the reference
        # back-pointer chase exactly.
        idx = first_argmax(rows[T - 1])                                 # (1, 1)
        seq_row = jnp.where(lane_iota == (T - 1), idx, 0)               # (1, 128) int32
        for i in range(T - 2, -1, -1):
            onehot = jnp.where(lane_iota == idx, 1.0, 0.0)              # one-hot of tag[i+1]
            back = jnp.dot(onehot, transT,
                           preferred_element_type=jnp.float32)          # (1, 128) = trans[:, tag]
            idx = first_argmax(rows[i] + back)
            seq_row = seq_row + jnp.where(lane_iota == i, idx, 0)

        seq_ref[b:b + 1, :] = seq_row[:, 0:T]


def patcrf_map(label_emissions, pattern_emissions, tables, block_batch=None):
    B, T, n_labels = label_emissions.shape
    n_patterns = int(pattern_emissions.shape[-1]) if pattern_emissions.size > 0 else 0
    n_tags = tables['n_tags']
    NT_S = max(8, -(-n_tags // 8) * 8)        # prev-tag axis padded to sublane multiple
    assert n_labels + n_patterns <= LANE and n_tags <= LANE

    # Batch blocking: BB batch elements per grid step.  Keep >= 2 grid blocks
    # when B >= 2 so both v7x TensorCores get work; amortize grid-step overhead
    # for larger batches.
    if block_batch is None:
        block_batch = 1 if B <= 2 else max(1, min(8, B // 2))
    BB = block_batch
    grid_b = pl.cdiv(B, BB)
    B_pad = grid_b * BB

    # Packed emissions: one (T, 128) tensor per batch element.
    em = np.zeros((B_pad, T, LANE), np.float32)
    em[:B, :, :n_labels] = np.asarray(label_emissions, np.float32)
    if n_patterns:
        em[:B, :, n_labels:n_labels + n_patterns] = np.asarray(
            pattern_emissions, np.float32)
    em = em.reshape(grid_b, BB, T, LANE)

    # Combined emission matrix W: rows [0,nL) are the one-hot tag2label gather,
    # rows [nL, nL+nP) are tag_patterns^T.  x = em @ W reproduces
    #   label_em[:, :, tag2label] + pattern_em @ tag_patterns.T
    tag2label = np.asarray(tables['tag2label'])
    W = np.zeros((LANE, LANE), np.float32)
    W[tag2label, np.arange(n_tags)] = 1.0
    if n_patterns:
        W[n_labels:n_labels + n_patterns, :n_tags] = tables['tag_patterns'].T

    trans_real = np.asarray(tables['transitions'], np.float32)          # (n_tags, n_tags)
    trans_pad = np.full((NT_S, LANE), NEG_BIG, np.float32)
    trans_pad[:n_tags, :n_tags] = trans_real
    transT_pad = np.full((LANE, LANE), NEG_BIG, np.float32)
    transT_pad[:n_tags, :n_tags] = trans_real.T

    eye = np.zeros((NT_S, LANE), np.float32)
    eye[np.arange(n_tags), np.arange(n_tags)] = 1.0

    start_mask = np.zeros((1, LANE), np.float32)
    start_mask[0, list(tables['start_tags'])] = 1.0

    seq = pl.pallas_call(
        patcrf_kernel,
        out_shape=jax.ShapeDtypeStruct((grid_b, BB, T), jnp.int32),
        grid=(grid_b,),
        in_specs=[
            pl.BlockSpec((None, BB, T, LANE), lambda g: (g, 0, 0, 0)),
            pl.BlockSpec((LANE, LANE), lambda g: (0, 0)),
            pl.BlockSpec((NT_S, LANE), lambda g: (0, 0)),
            pl.BlockSpec((LANE, LANE), lambda g: (0, 0)),
            pl.BlockSpec((NT_S, LANE), lambda g: (0, 0)),
            pl.BlockSpec((1, LANE), lambda g: (0, 0)),
        ],
        out_specs=pl.BlockSpec((None, BB, T), lambda g: (g, 0, 0)),
        compiler_params=pltpu.CompilerParams(
            dimension_semantics=("parallel",)),
    )(jnp.asarray(em), jnp.asarray(W), jnp.asarray(trans_pad),
      jnp.asarray(transT_pad), jnp.asarray(eye), jnp.asarray(start_mask))

    # TODO(synk): torch returns int64 tags; JAX default (x64 off) gives int32 ids.
    return seq.reshape(B_pad, T)[:B]


# ---------------------------------------------------------------------------
# Pure-numpy reference of PatCRF.map for verification (back-pointer chase).
# ---------------------------------------------------------------------------
def ref_map_numpy(label_emissions, pattern_emissions, tables):
    le = np.asarray(label_emissions, np.float32)
    pe = np.asarray(pattern_emissions, np.float32)
    n_tags = tables['n_tags']
    trans = tables['transitions']
    x = le[:, :, tables['tag2label']] + pe @ tables['tag_patterns'].T
    B, T, _ = x.shape
    logits = np.full((B, T, n_tags), -INF, np.float32)
    back_pointers = []
    for tag in tables['start_tags']:
        logits[:, 0, tag] = x[:, 0, tag]
    for i in range(1, T):
        xi = x[:, i, :]
        incoming = trans[None, :, :] + logits[:, i - 1][:, :, None] + xi[:, None, :]
        logits[:, i] = incoming.max(axis=1)
        back_pointers.append(incoming.argmax(axis=1))
    seq = np.zeros((B, T), np.int64)
    seq[:, -1] = logits[:, -1, :].argmax(axis=1)
    for i, bps in reversed(list(enumerate(back_pointers))):
        seq[:, i] = bps[np.arange(B), seq[:, i + 1]]
    return seq


if __name__ == "__main__":
    tables = build_patcrf_tables(seed=0)
    B, T = 2, 8

    key = jax.random.PRNGKey(0)
    k1, k2 = jax.random.split(key)
    label_emissions = jax.random.normal(k1, (B, T, tables['n_labels']),
                                        dtype=jnp.float32)
    pattern_emissions = jax.random.normal(k2, (B, T, tables['n_patterns']),
                                          dtype=jnp.float32)
    # Pre-round inputs to bf16-representable values so the in-kernel MXU
    # emission matmul is exact and the numpy check is bit-stable.
    label_emissions = label_emissions.astype(jnp.bfloat16).astype(jnp.float32)
    pattern_emissions = pattern_emissions.astype(jnp.bfloat16).astype(jnp.float32)

    out = patcrf_map(label_emissions, pattern_emissions, tables)
    out = jax.block_until_ready(out)

    ref = ref_map_numpy(label_emissions, pattern_emissions, tables)
    assert out.shape == (B, T), (out.shape, (B, T))
    assert np.array_equal(np.asarray(out, np.int64), ref), (np.asarray(out), ref)
    print("KERNEL_OK")
</pallas_src>

<mosaic_0001>
module attributes {stable_mosaic.version = 11 : i64} {
  func.func @patcrf_kernel(%arg0: i32, %arg1: memref<1x1x8x128xf32, #tpu.memory_space<vmem>>, %arg2: memref<128x128xf32, #tpu.memory_space<vmem>>, %arg3: memref<8x128xf32, #tpu.memory_space<vmem>>, %arg4: memref<128x128xf32, #tpu.memory_space<vmem>>, %arg5: memref<8x128xf32, #tpu.memory_space<vmem>>, %arg6: memref<1x128xf32, #tpu.memory_space<vmem>>, %arg7: memref<1x1x8xi32, #tpu.memory_space<vmem>>) attributes {dimension_semantics = [#tpu.dimension_semantics<parallel>], iteration_bounds = array<i64: 2>, scalar_prefetch = 0 : i64, scratch_operands = 0 : i64, tpu.core_type = #tpu.core_type<tc>, window_params = [{transform_indices = @transform_0, window_bounds = array<i64: 1, 1, 8, 128>}, {pipeline_mode = #tpu.pipeline_mode<synchronous>, transform_indices = @transform_1, window_bounds = array<i64: 128, 128>}, {pipeline_mode = #tpu.pipeline_mode<synchronous>, transform_indices = @transform_2, window_bounds = array<i64: 8, 128>}, {pipeline_mode = #tpu.pipeline_mode<synchronous>, transform_indices = @transform_3, window_bounds = array<i64: 128, 128>}, {pipeline_mode = #tpu.pipeline_mode<synchronous>, transform_indices = @transform_4, window_bounds = array<i64: 8, 128>}, {pipeline_mode = #tpu.pipeline_mode<synchronous>, transform_indices = @transform_5, window_bounds = array<i64: 1, 128>}, {transform_indices = @transform_6, window_bounds = array<i64: 1, 1, 8>}]} {
    %c0 = arith.constant 0 : index
    %c0_0 = arith.constant 0 : index
    %0 = vector.load %arg2[%c0, %c0_0] : memref<128x128xf32, #tpu.memory_space<vmem>>, vector<128x128xf32>
    %c0_1 = arith.constant 0 : index
    %c0_2 = arith.constant 0 : index
    %1 = vector.load %arg3[%c0_1, %c0_2] : memref<8x128xf32, #tpu.memory_space<vmem>>, vector<8x128xf32>
    %c0_3 = arith.constant 0 : index
    %c0_4 = arith.constant 0 : index
    %2 = vector.load %arg4[%c0_3, %c0_4] : memref<128x128xf32, #tpu.memory_space<vmem>>, vector<128x128xf32>
    %c0_5 = arith.constant 0 : index
    %c0_6 = arith.constant 0 : index
    %3 = vector.load %arg5[%c0_5, %c0_6] : memref<8x128xf32, #tpu.memory_space<vmem>>, vector<8x128xf32>
    %c0_7 = arith.constant 0 : index
    %c0_8 = arith.constant 0 : index
    %4 = vector.load %arg6[%c0_7, %c0_8] : memref<1x128xf32, #tpu.memory_space<vmem>>, vector<1x128xf32>
    %5 = tpu.iota {dimensions = array<i32: 1>} : vector<1x128xi32>
    %c0_9 = arith.constant 0 : index
    %c0_10 = arith.constant 0 : index
    %c0_11 = arith.constant 0 : index
    %c0_12 = arith.constant 0 : index
    %6 = vector.load %arg1[%c0_9, %c0_10, %c0_11, %c0_12] : memref<1x1x8x128xf32, #tpu.memory_space<vmem>>, vector<1x1x8x128xf32>
    %7 = vector.shape_cast %6 : vector<1x1x8x128xf32> to vector<8x128xf32>
    %cst = arith.constant dense<0.000000e+00> : vector<8x128xf32>
    %8 = tpu.matmul %7, %0, %cst {dimension_numbers = #tpu.dot_dimension_numbers<[1], [0], [0], [1], [0, 0, 1, 1], [], []>} : vector<8x128xf32>, vector<128x128xf32>, vector<8x128xf32> -> vector<8x128xf32>
    %cst_13 = arith.constant 5.000000e-01 : f32
    %9 = vector.broadcast %cst_13 : f32 to vector<1x128xf32>
    %10 = arith.cmpf ogt, %4, %9 : vector<1x128xf32>
    %11 = vector.extract_strided_slice %8 {offsets = [0, 0], sizes = [1, 128], strides = [1, 1]} : vector<8x128xf32> to vector<1x128xf32>
    %cst_14 = arith.constant -1.000000e+04 : f32
    %12 = vector.broadcast %cst_14 : f32 to vector<1x128xf32>
    %13 = arith.select %10, %11, %12 : vector<1x128xi1>, vector<1x128xf32>
    %14 = vector.broadcast %13 : vector<1x128xf32> to vector<8x128xf32>
    %15 = arith.mulf %3, %14 : vector<8x128xf32>
    %cst_15 = arith.constant dense<0.000000e+00> : vector<8xf32>
    %16 = vector.multi_reduction <add>, %15, %cst_15 [1] : vector<8x128xf32> to vector<8xf32>
    %17 = vector.shape_cast %16 : vector<8xf32> to vector<8x1xf32>
    %18 = vector.broadcast %17 : vector<8x1xf32> to vector<8x128xf32>
    %19 = arith.addf %1, %18 : vector<8x128xf32>
    %cst_16 = arith.constant dense<0xFF800000> : vector<128xf32>
    %20 = vector.multi_reduction <maximumf>, %19, %cst_16 [0] : vector<8x128xf32> to vector<128xf32>
    %21 = vector.shape_cast %20 : vector<128xf32> to vector<1x128xf32>
    %22 = vector.extract_strided_slice %8 {offsets = [1, 0], sizes = [1, 128], strides = [1, 1]} : vector<8x128xf32> to vector<1x128xf32>
    %23 = arith.addf %21, %22 : vector<1x128xf32>
    %24 = vector.broadcast %23 : vector<1x128xf32> to vector<8x128xf32>
    %25 = arith.mulf %3, %24 : vector<8x128xf32>
    %cst_17 = arith.constant dense<0.000000e+00> : vector<8xf32>
    %26 = vector.multi_reduction <add>, %25, %cst_17 [1] : vector<8x128xf32> to vector<8xf32>
    %27 = vector.shape_cast %26 : vector<8xf32> to vector<8x1xf32>
    %28 = vector.broadcast %27 : vector<8x1xf32> to vector<8x128xf32>
    %29 = arith.addf %1, %28 : vector<8x128xf32>
    %cst_18 = arith.constant dense<0xFF800000> : vector<128xf32>
    %30 = vector.multi_reduction <maximumf>, %29, %cst_18 [0] : vector<8x128xf32> to vector<128xf32>
    %31 = vector.shape_cast %30 : vector<128xf32> to vector<1x128xf32>
    %32 = vector.extract_strided_slice %8 {offsets = [2, 0], sizes = [1, 128], strides = [1, 1]} : vector<8x128xf32> to vector<1x128xf32>
    %33 = arith.addf %31, %32 : vector<1x128xf32>
    %34 = vector.broadcast %33 : vector<1x128xf32> to vector<8x128xf32>
    %35 = arith.mulf %3, %34 : vector<8x128xf32>
    %cst_19 = arith.constant dense<0.000000e+00> : vector<8xf32>
    %36 = vector.multi_reduction <add>, %35, %cst_19 [1] : vector<8x128xf32> to vector<8xf32>
    %37 = vector.shape_cast %36 : vector<8xf32> to vector<8x1xf32>
    %38 = vector.broadcast %37 : vector<8x1xf32> to vector<8x128xf32>
    %39 = arith.addf %1, %38 : vector<8x128xf32>
    %cst_20 = arith.constant dense<0xFF800000> : vector<128xf32>
    %40 = vector.multi_reduction <maximumf>, %39, %cst_20 [0] : vector<8x128xf32> to vector<128xf32>
    %41 = vector.shape_cast %40 : vector<128xf32> to vector<1x128xf32>
    %42 = vector.extract_strided_slice %8 {offsets = [3, 0], sizes = [1, 128], strides = [1, 1]} : vector<8x128xf32> to vector<1x128xf32>
    %43 = arith.addf %41, %42 : vector<1x128xf32>
    %44 = vector.broadcast %43 : vector<1x128xf32> to vector<8x128xf32>
    %45 = arith.mulf %3, %44 : vector<8x128xf32>
    %cst_21 = arith.constant dense<0.000000e+00> : vector<8xf32>
    %46 = vector.multi_reduction <add>, %45, %cst_21 [1] : vector<8x128xf32> to vector<8xf32>
    %47 = vector.shape_cast %46 : vector<8xf32> to vector<8x1xf32>
    %48 = vector.broadcast %47 : vector<8x1xf32> to vector<8x128xf32>
    %49 = arith.addf %1, %48 : vector<8x128xf32>
    %cst_22 = arith.constant dense<0xFF800000> : vector<128xf32>
    %50 = vector.multi_reduction <maximumf>, %49, %cst_22 [0] : vector<8x128xf32> to vector<128xf32>
    %51 = vector.shape_cast %50 : vector<128xf32> to vector<1x128xf32>
    %52 = vector.extract_strided_slice %8 {offsets = [4, 0], sizes = [1, 128], strides = [1, 1]} : vector<8x128xf32> to vector<1x128xf32>
    %53 = arith.addf %51, %52 : vector<1x128xf32>
    %54 = vector.broadcast %53 : vector<1x128xf32> to vector<8x128xf32>
    %55 = arith.mulf %3, %54 : vector<8x128xf32>
    %cst_23 = arith.constant dense<0.000000e+00> : vector<8xf32>
    %56 = vector.multi_reduction <add>, %55, %cst_23 [1] : vector<8x128xf32> to vector<8xf32>
    %57 = vector.shape_cast %56 : vector<8xf32> to vector<8x1xf32>
    %58 = vector.broadcast %57 : vector<8x1xf32> to vector<8x128xf32>
    %59 = arith.addf %1, %58 : vector<8x128xf32>
    %cst_24 = arith.constant dense<0xFF800000> : vector<128xf32>
    %60 = vector.multi_reduction <maximumf>, %59, %cst_24 [0] : vector<8x128xf32> to vector<128xf32>
    %61 = vector.shape_cast %60 : vector<128xf32> to vector<1x128xf32>
    %62 = vector.extract_strided_slice %8 {offsets = [5, 0], sizes = [1, 128], strides = [1, 1]} : vector<8x128xf32> to vector<1x128xf32>
    %63 = arith.addf %61, %62 : vector<1x128xf32>
    %64 = vector.broadcast %63 : vector<1x128xf32> to vector<8x128xf32>
    %65 = arith.mulf %3, %64 : vector<8x128xf32>
    %cst_25 = arith.constant dense<0.000000e+00> : vector<8xf32>
    %66 = vector.multi_reduction <add>, %65, %cst_25 [1] : vector<8x128xf32> to vector<8xf32>
    %67 = vector.shape_cast %66 : vector<8xf32> to vector<8x1xf32>
    %68 = vector.broadcast %67 : vector<8x1xf32> to vector<8x128xf32>
    %69 = arith.addf %1, %68 : vector<8x128xf32>
    %cst_26 = arith.constant dense<0xFF800000> : vector<128xf32>
    %70 = vector.multi_reduction <maximumf>, %69, %cst_26 [0] : vector<8x128xf32> to vector<128xf32>
    %71 = vector.shape_cast %70 : vector<128xf32> to vector<1x128xf32>
    %72 = vector.extract_strided_slice %8 {offsets = [6, 0], sizes = [1, 128], strides = [1, 1]} : vector<8x128xf32> to vector<1x128xf32>
    %73 = arith.addf %71, %72 : vector<1x128xf32>
    %74 = vector.broadcast %73 : vector<1x128xf32> to vector<8x128xf32>
    %75 = arith.mulf %3, %74 : vector<8x128xf32>
    %cst_27 = arith.constant dense<0.000000e+00> : vector<8xf32>
    %76 = vector.multi_reduction <add>, %75, %cst_27 [1] : vector<8x128xf32> to vector<8xf32>
    %77 = vector.shape_cast %76 : vector<8xf32> to vector<8x1xf32>
    %78 = vector.broadcast %77 : vector<8x1xf32> to vector<8x128xf32>
    %79 = arith.addf %1, %78 : vector<8x128xf32>
    %cst_28 = arith.constant dense<0xFF800000> : vector<128xf32>
    %80 = vector.multi_reduction <maximumf>, %79, %cst_28 [0] : vector<8x128xf32> to vector<128xf32>
    %81 = vector.shape_cast %80 : vector<128xf32> to vector<1x128xf32>
    %82 = vector.extract_strided_slice %8 {offsets = [7, 0], sizes = [1, 128], strides = [1, 1]} : vector<8x128xf32> to vector<1x128xf32>
    %83 = arith.addf %81, %82 : vector<1x128xf32>
    %cst_29 = arith.constant dense<0xFF800000> : vector<1xf32>
    %84 = vector.multi_reduction <maximumf>, %83, %cst_29 [1] : vector<1x128xf32> to vector<1xf32>
    %85 = vector.shape_cast %84 : vector<1xf32> to vector<1x1xf32>
    %86 = vector.broadcast %85 : vector<1x1xf32> to vector<1x128xf32>
    %87 = arith.cmpf oeq, %83, %86 : vector<1x128xf32>
    %c128_i32 = arith.constant 128 : i32
    %88 = vector.broadcast %c128_i32 : i32 to vector<1x128xi32>
    %89 = arith.select %87, %5, %88 : vector<1x128xi1>, vector<1x128xi32>
    %cst_30 = arith.constant dense<2147483647> : vector<1xi32>
    %90 = vector.multi_reduction <minsi>, %89, %cst_30 [1] : vector<1x128xi32> to vector<1xi32>
    %91 = vector.shape_cast %90 : vector<1xi32> to vector<1x1xi32>
    %c7_i32 = arith.constant 7 : i32
    %92 = vector.broadcast %c7_i32 : i32 to vector<1x128xi32>
    %93 = arith.cmpi eq, %5, %92 : vector<1x128xi32>
    %c0_i32 = arith.constant 0 : i32
    %94 = vector.shape_cast %91 : vector<1x1xi32> to vector<1x1xi32>
    %95 = vector.broadcast %94 : vector<1x1xi32> to vector<1x128xi32>
    %96 = vector.broadcast %c0_i32 : i32 to vector<1x128xi32>
    %97 = arith.select %93, %95, %96 : vector<1x128xi1>, vector<1x128xi32>
    %98 = vector.broadcast %91 : vector<1x1xi32> to vector<1x128xi32>
    %99 = arith.cmpi eq, %5, %98 : vector<1x128xi32>
    %cst_31 = arith.constant 1.000000e+00 : f32
    %cst_32 = arith.constant 0.000000e+00 : f32
    %100 = vector.broadcast %cst_31 : f32 to vector<1x128xf32>
    %101 = vector.broadcast %cst_32 : f32 to vector<1x128xf32>
    %102 = arith.select %99, %100, %101 : vector<1x128xi1>, vector<1x128xf32>
    %cst_33 = arith.constant dense<0.000000e+00> : vector<1x128xf32>
    %103 = tpu.matmul %102, %2, %cst_33 {dimension_numbers = #tpu.dot_dimension_numbers<[1], [0], [0], [1], [0, 0, 1, 1], [], []>} : vector<1x128xf32>, vector<128x128xf32>, vector<1x128xf32> -> vector<1x128xf32>
    %104 = arith.addf %73, %103 : vector<1x128xf32>
    %cst_34 = arith.constant dense<0xFF800000> : vector<1xf32>
    %105 = vector.multi_reduction <maximumf>, %104, %cst_34 [1] : vector<1x128xf32> to vector<1xf32>
    %106 = vector.shape_cast %105 : vector<1xf32> to vector<1x1xf32>
    %107 = vector.broadcast %106 : vector<1x1xf32> to vector<1x128xf32>
    %108 = arith.cmpf oeq, %104, %107 : vector<1x128xf32>
    %c128_i32_35 = arith.constant 128 : i32
    %109 = vector.broadcast %c128_i32_35 : i32 to vector<1x128xi32>
    %110 = arith.select %108, %5, %109 : vector<1x128xi1>, vector<1x128xi32>
    %cst_36 = arith.constant dense<2147483647> : vector<1xi32>
    %111 = vector.multi_reduction <minsi>, %110, %cst_36 [1] : vector<1x128xi32> to vector<1xi32>
    %112 = vector.shape_cast %111 : vector<1xi32> to vector<1x1xi32>
    %c6_i32 = arith.constant 6 : i32
    %113 = vector.broadcast %c6_i32 : i32 to vector<1x128xi32>
    %114 = arith.cmpi eq, %5, %113 : vector<1x128xi32>
    %c0_i32_37 = arith.constant 0 : i32
    %115 = vector.shape_cast %112 : vector<1x1xi32> to vector<1x1xi32>
    %116 = vector.broadcast %115 : vector<1x1xi32> to vector<1x128xi32>
    %117 = vector.broadcast %c0_i32_37 : i32 to vector<1x128xi32>
    %118 = arith.select %114, %116, %117 : vector<1x128xi1>, vector<1x128xi32>
    %119 = arith.addi %97, %118 : vector<1x128xi32>
    %120 = vector.broadcast %112 : vector<1x1xi32> to vector<1x128xi32>
    %121 = arith.cmpi eq, %5, %120 : vector<1x128xi32>
    %cst_38 = arith.constant 1.000000e+00 : f32
    %cst_39 = arith.constant 0.000000e+00 : f32
    %122 = vector.broadcast %cst_38 : f32 to vector<1x128xf32>
    %123 = vector.broadcast %cst_39 : f32 to vector<1x128xf32>
    %124 = arith.select %121, %122, %123 : vector<1x128xi1>, vector<1x128xf32>
    %cst_40 = arith.constant dense<0.000000e+00> : vector<1x128xf32>
    %125 = tpu.matmul %124, %2, %cst_40 {dimension_numbers = #tpu.dot_dimension_numbers<[1], [0], [0], [1], [0, 0, 1, 1], [], []>} : vector<1x128xf32>, vector<128x128xf32>, vector<1x128xf32> -> vector<1x128xf32>
    %126 = arith.addf %63, %125 : vector<1x128xf32>
    %cst_41 = arith.constant dense<0xFF800000> : vector<1xf32>
    %127 = vector.multi_reduction <maximumf>, %126, %cst_41 [1] : vector<1x128xf32> to vector<1xf32>
    %128 = vector.shape_cast %127 : vector<1xf32> to vector<1x1xf32>
    %129 = vector.broadcast %128 : vector<1x1xf32> to vector<1x128xf32>
    %130 = arith.cmpf oeq, %126, %129 : vector<1x128xf32>
    %c128_i32_42 = arith.constant 128 : i32
    %131 = vector.broadcast %c128_i32_42 : i32 to vector<1x128xi32>
    %132 = arith.select %130, %5, %131 : vector<1x128xi1>, vector<1x128xi32>
    %cst_43 = arith.constant dense<2147483647> : vector<1xi32>
    %133 = vector.multi_reduction <minsi>, %132, %cst_43 [1] : vector<1x128xi32> to vector<1xi32>
    %134 = vector.shape_cast %133 : vector<1xi32> to vector<1x1xi32>
    %c5_i32 = arith.constant 5 : i32
    %135 = vector.broadcast %c5_i32 : i32 to vector<1x128xi32>
    %136 = arith.cmpi eq, %5, %135 : vector<1x128xi32>
    %c0_i32_44 = arith.constant 0 : i32
    %137 = vector.shape_cast %134 : vector<1x1xi32> to vector<1x1xi32>
    %138 = vector.broadcast %137 : vector<1x1xi32> to vector<1x128xi32>
    %139 = vector.broadcast %c0_i32_44 : i32 to vector<1x128xi32>
    %140 = arith.select %136, %138, %139 : vector<1x128xi1>, vector<1x128xi32>
    %141 = arith.addi %119, %140 : vector<1x128xi32>
    %142 = vector.broadcast %134 : vector<1x1xi32> to vector<1x128xi32>
    %143 = arith.cmpi eq, %5, %142 : vector<1x128xi32>
    %cst_45 = arith.constant 1.000000e+00 : f32
    %cst_46 = arith.constant 0.000000e+00 : f32
    %144 = vector.broadcast %cst_45 : f32 to vector<1x128xf32>
    %145 = vector.broadcast %cst_46 : f32 to vector<1x128xf32>
    %146 = arith.select %143, %144, %145 : vector<1x128xi1>, vector<1x128xf32>
    %cst_47 = arith.constant dense<0.000000e+00> : vector<1x128xf32>
    %147 = tpu.matmul %146, %2, %cst_47 {dimension_numbers = #tpu.dot_dimension_numbers<[1], [0], [0], [1], [0, 0, 1, 1], [], []>} : vector<1x128xf32>, vector<128x128xf32>, vector<1x128xf32> -> vector<1x128xf32>
    %148 = arith.addf %53, %147 : vector<1x128xf32>
    %cst_48 = arith.constant dense<0xFF800000> : vector<1xf32>
    %149 = vector.multi_reduction <maximumf>, %148, %cst_48 [1] : vector<1x128xf32> to vector<1xf32>
    %150 = vector.shape_cast %149 : vector<1xf32> to vector<1x1xf32>
    %151 = vector.broadcast %150 : vector<1x1xf32> to vector<1x128xf32>
    %152 = arith.cmpf oeq, %148, %151 : vector<1x128xf32>
    %c128_i32_49 = arith.constant 128 : i32
    %153 = vector.broadcast %c128_i32_49 : i32 to vector<1x128xi32>
    %154 = arith.select %152, %5, %153 : vector<1x128xi1>, vector<1x128xi32>
    %cst_50 = arith.constant dense<2147483647> : vector<1xi32>
    %155 = vector.multi_reduction <minsi>, %154, %cst_50 [1] : vector<1x128xi32> to vector<1xi32>
    %156 = vector.shape_cast %155 : vector<1xi32> to vector<1x1xi32>
    %c4_i32 = arith.constant 4 : i32
    %157 = vector.broadcast %c4_i32 : i32 to vector<1x128xi32>
    %158 = arith.cmpi eq, %5, %157 : vector<1x128xi32>
    %c0_i32_51 = arith.constant 0 : i32
    %159 = vector.shape_cast %156 : vector<1x1xi32> to vector<1x1xi32>
    %160 = vector.broadcast %159 : vector<1x1xi32> to vector<1x128xi32>
    %161 = vector.broadcast %c0_i32_51 : i32 to vector<1x128xi32>
    %162 = arith.select %158, %160, %161 : vector<1x128xi1>, vector<1x128xi32>
    %163 = arith.addi %141, %162 : vector<1x128xi32>
    %164 = vector.broadcast %156 : vector<1x1xi32> to vector<1x128xi32>
    %165 = arith.cmpi eq, %5, %164 : vector<1x128xi32>
    %cst_52 = arith.constant 1.000000e+00 : f32
    %cst_53 = arith.constant 0.000000e+00 : f32
    %166 = vector.broadcast %cst_52 : f32 to vector<1x128xf32>
    %167 = vector.broadcast %cst_53 : f32 to vector<1x128xf32>
    %168 = arith.select %165, %166, %167 : vector<1x128xi1>, vector<1x128xf32>
    %cst_54 = arith.constant dense<0.000000e+00> : vector<1x128xf32>
    %169 = tpu.matmul %168, %2, %cst_54 {dimension_numbers = #tpu.dot_dimension_numbers<[1], [0], [0], [1], [0, 0, 1, 1], [], []>} : vector<1x128xf32>, vector<128x128xf32>, vector<1x128xf32> -> vector<1x128xf32>
    %170 = arith.addf %43, %169 : vector<1x128xf32>
    %cst_55 = arith.constant dense<0xFF800000> : vector<1xf32>
    %171 = vector.multi_reduction <maximumf>, %170, %cst_55 [1] : vector<1x128xf32> to vector<1xf32>
    %172 = vector.shape_cast %171 : vector<1xf32> to vector<1x1xf32>
    %173 = vector.broadcast %172 : vector<1x1xf32> to vector<1x128xf32>
    %174 = arith.cmpf oeq, %170, %173 : vector<1x128xf32>
    %c128_i32_56 = arith.constant 128 : i32
    %175 = vector.broadcast %c128_i32_56 : i32 to vector<1x128xi32>
    %176 = arith.select %174, %5, %175 : vector<1x128xi1>, vector<1x128xi32>
    %cst_57 = arith.constant dense<2147483647> : vector<1xi32>
    %177 = vector.multi_reduction <minsi>, %176, %cst_57 [1] : vector<1x128xi32> to vector<1xi32>
    %178 = vector.shape_cast %177 : vector<1xi32> to vector<1x1xi32>
    %c3_i32 = arith.constant 3 : i32
    %179 = vector.broadcast %c3_i32 : i32 to vector<1x128xi32>
    %180 = arith.cmpi eq, %5, %179 : vector<1x128xi32>
    %c0_i32_58 = arith.constant 0 : i32
    %181 = vector.shape_cast %178 : vector<1x1xi32> to vector<1x1xi32>
    %182 = vector.broadcast %181 : vector<1x1xi32> to vector<1x128xi32>
    %183 = vector.broadcast %c0_i32_58 : i32 to vector<1x128xi32>
    %184 = arith.select %180, %182, %183 : vector<1x128xi1>, vector<1x128xi32>
    %185 = arith.addi %163, %184 : vector<1x128xi32>
    %186 = vector.broadcast %178 : vector<1x1xi32> to vector<1x128xi32>
    %187 = arith.cmpi eq, %5, %186 : vector<1x128xi32>
    %cst_59 = arith.constant 1.000000e+00 : f32
    %cst_60 = arith.constant 0.000000e+00 : f32
    %188 = vector.broadcast %cst_59 : f32 to vector<1x128xf32>
    %189 = vector.broadcast %cst_60 : f32 to vector<1x128xf32>
    %190 = arith.select %187, %188, %189 : vector<1x128xi1>, vector<1x128xf32>
    %cst_61 = arith.constant dense<0.000000e+00> : vector<1x128xf32>
    %191 = tpu.matmul %190, %2, %cst_61 {dimension_numbers = #tpu.dot_dimension_numbers<[1], [0], [0], [1], [0, 0, 1, 1], [], []>} : vector<1x128xf32>, vector<128x128xf32>, vector<1x128xf32> -> vector<1x128xf32>
    %192 = arith.addf %33, %191 : vector<1x128xf32>
    %cst_62 = arith.constant dense<0xFF800000> : vector<1xf32>
    %193 = vector.multi_reduction <maximumf>, %192, %cst_62 [1] : vector<1x128xf32> to vector<1xf32>
    %194 = vector.shape_cast %193 : vector<1xf32> to vector<1x1xf32>
    %195 = vector.broadcast %194 : vector<1x1xf32> to vector<1x128xf32>
    %196 = arith.cmpf oeq, %192, %195 : vector<1x128xf32>
    %c128_i32_63 = arith.constant 128 : i32
    %197 = vector.broadcast %c128_i32_63 : i32 to vector<1x128xi32>
    %198 = arith.select %196, %5, %197 : vector<1x128xi1>, vector<1x128xi32>
    %cst_64 = arith.constant dense<2147483647> : vector<1xi32>
    %199 = vector.multi_reduction <minsi>, %198, %cst_64 [1] : vector<1x128xi32> to vector<1xi32>
    %200 = vector.shape_cast %199 : vector<1xi32> to vector<1x1xi32>
    %c2_i32 = arith.constant 2 : i32
    %201 = vector.broadcast %c2_i32 : i32 to vector<1x128xi32>
    %202 = arith.cmpi eq, %5, %201 : vector<1x128xi32>
    %c0_i32_65 = arith.constant 0 : i32
    %203 = vector.shape_cast %200 : vector<1x1xi32> to vector<1x1xi32>
    %204 = vector.broadcast %203 : vector<1x1xi32> to vector<1x128xi32>
    %205 = vector.broadcast %c0_i32_65 : i32 to vector<1x128xi32>
    %206 = arith.select %202, %204, %205 : vector<1x128xi1>, vector<1x128xi32>
    %207 = arith.addi %185, %206 : vector<1x128xi32>
    %208 = vector.broadcast %200 : vector<1x1xi32> to vector<1x128xi32>
    %209 = arith.cmpi eq, %5, %208 : vector<1x128xi32>
    %cst_66 = arith.constant 1.000000e+00 : f32
    %cst_67 = arith.constant 0.000000e+00 : f32
    %210 = vector.broadcast %cst_66 : f32 to vector<1x128xf32>
    %211 = vector.broadcast %cst_67 : f32 to vector<1x128xf32>
    %212 = arith.select %209, %210, %211 : vector<1x128xi1>, vector<1x128xf32>
    %cst_68 = arith.constant dense<0.000000e+00> : vector<1x128xf32>
    %213 = tpu.matmul %212, %2, %cst_68 {dimension_numbers = #tpu.dot_dimension_numbers<[1], [0], [0], [1], [0, 0, 1, 1], [], []>} : vector<1x128xf32>, vector<128x128xf32>, vector<1x128xf32> -> vector<1x128xf32>
    %214 = arith.addf %23, %213 : vector<1x128xf32>
    %cst_69 = arith.constant dense<0xFF800000> : vector<1xf32>
    %215 = vector.multi_reduction <maximumf>, %214, %cst_69 [1] : vector<1x128xf32> to vector<1xf32>
    %216 = vector.shape_cast %215 : vector<1xf32> to vector<1x1xf32>
    %217 = vector.broadcast %216 : vector<1x1xf32> to vector<1x128xf32>
    %218 = arith.cmpf oeq, %214, %217 : vector<1x128xf32>
    %c128_i32_70 = arith.constant 128 : i32
    %219 = vector.broadcast %c128_i32_70 : i32 to vector<1x128xi32>
    %220 = arith.select %218, %5, %219 : vector<1x128xi1>, vector<1x128xi32>
    %cst_71 = arith.constant dense<2147483647> : vector<1xi32>
    %221 = vector.multi_reduction <minsi>, %220, %cst_71 [1] : vector<1x128xi32> to vector<1xi32>
    %222 = vector.shape_cast %221 : vector<1xi32> to vector<1x1xi32>
    %c1_i32 = arith.constant 1 : i32
    %223 = vector.broadcast %c1_i32 : i32 to vector<1x128xi32>
    %224 = arith.cmpi eq, %5, %223 : vector<1x128xi32>
    %c0_i32_72 = arith.constant 0 : i32
    %225 = vector.shape_cast %222 : vector<1x1xi32> to vector<1x1xi32>
    %226 = vector.broadcast %225 : vector<1x1xi32> to vector<1x128xi32>
    %227 = vector.broadcast %c0_i32_72 : i32 to vector<1x128xi32>
    %228 = arith.select %224, %226, %227 : vector<1x128xi1>, vector<1x128xi32>
    %229 = arith.addi %207, %228 : vector<1x128xi32>
    %230 = vector.broadcast %222 : vector<1x1xi32> to vector<1x128xi32>
    %231 = arith.cmpi eq, %5, %230 : vector<1x128xi32>
    %cst_73 = arith.constant 1.000000e+00 : f32
    %cst_74 = arith.constant 0.000000e+00 : f32
    %232 = vector.broadcast %cst_73 : f32 to vector<1x128xf32>
    %233 = vector.broadcast %cst_74 : f32 to vector<1x128xf32>
    %234 = arith.select %231, %232, %233 : vector<1x128xi1>, vector<1x128xf32>
    %cst_75 = arith.constant dense<0.000000e+00> : vector<1x128xf32>
    %235 = tpu.matmul %234, %2, %cst_75 {dimension_numbers = #tpu.dot_dimension_numbers<[1], [0], [0], [1], [0, 0, 1, 1], [], []>} : vector<1x128xf32>, vector<128x128xf32>, vector<1x128xf32> -> vector<1x128xf32>
    %236 = arith.addf %13, %235 : vector<1x128xf32>
    %cst_76 = arith.constant dense<0xFF800000> : vector<1xf32>
    %237 = vector.multi_reduction <maximumf>, %236, %cst_76 [1] : vector<1x128xf32> to vector<1xf32>
    %238 = vector.shape_cast %237 : vector<1xf32> to vector<1x1xf32>
    %239 = vector.broadcast %238 : vector<1x1xf32> to vector<1x128xf32>
    %240 = arith.cmpf oeq, %236, %239 : vector<1x128xf32>
    %c128_i32_77 = arith.constant 128 : i32
    %241 = vector.broadcast %c128_i32_77 : i32 to vector<1x128xi32>
    %242 = arith.select %240, %5, %241 : vector<1x128xi1>, vector<1x128xi32>
    %cst_78 = arith.constant dense<2147483647> : vector<1xi32>
    %243 = vector.multi_reduction <minsi>, %242, %cst_78 [1] : vector<1x128xi32> to vector<1xi32>
    %244 = vector.shape_cast %243 : vector<1xi32> to vector<1x1xi32>
    %c0_i32_79 = arith.constant 0 : i32
    %245 = vector.broadcast %c0_i32_79 : i32 to vector<1x128xi32>
    %246 = arith.cmpi eq, %5, %245 : vector<1x128xi32>
    %c0_i32_80 = arith.constant 0 : i32
    %247 = vector.shape_cast %244 : vector<1x1xi32> to vector<1x1xi32>
    %248 = vector.broadcast %247 : vector<1x1xi32> to vector<1x128xi32>
    %249 = vector.broadcast %c0_i32_80 : i32 to vector<1x128xi32>
    %250 = arith.select %246, %248, %249 : vector<1x128xi1>, vector<1x128xi32>
    %251 = arith.addi %229, %250 : vector<1x128xi32>
    %252 = vector.extract_strided_slice %251 {offsets = [0, 0], sizes = [1, 8], strides = [1, 1]} : vector<1x128xi32> to vector<1x8xi32>
    %c0_81 = arith.constant 0 : index
    %c0_82 = arith.constant 0 : index
    %c0_83 = arith.constant 0 : index
    %253 = vector.load %arg7[%c0_81, %c0_82, %c0_83] : memref<1x1x8xi32, #tpu.memory_space<vmem>>, vector<1x1x8xi32>
    %254 = vector.shape_cast %253 : vector<1x1x8xi32> to vector<1x8xi32>
    %255 = vector.shape_cast %252 : vector<1x8xi32> to vector<1x1x8xi32>
    tpu.vector_store %arg7[%c0_81, %c0_82, %c0_83], %255 {strides = array<i32>} : memref<1x1x8xi32, #tpu.memory_space<vmem>>, vector<1x1x8xi32>,
    return
  }
  func.func @transform_0(%arg0: i32) -> (i32, i32, i32, i32) {
    %c0_i32 = arith.constant 0 : i32
    %c0_i32_0 = arith.constant 0 : i32
    %c0_i32_1 = arith.constant 0 : i32
    %c0_i32_2 = arith.constant 0 : i32
    return %arg0, %c0_i32, %c0_i32_0, %c0_i32_1 : i32, i32, i32, i32
  }
  func.func @transform_1(%arg0: i32) -> (i32, i32) {
    %c0_i32 = arith.constant 0 : i32
    %c0_i32_0 = arith.constant 0 : i32
    %c0_i32_1 = arith.constant 0 : i32
    return %c0_i32, %c0_i32_0 : i32, i32
  }
  func.func @transform_2(%arg0: i32) -> (i32, i32) {
    %c0_i32 = arith.constant 0 : i32
    %c0_i32_0 = arith.constant 0 : i32
    %c0_i32_1 = arith.constant 0 : i32
    return %c0_i32, %c0_i32_0 : i32, i32
  }
  func.func @transform_3(%arg0: i32) -> (i32, i32) {
    %c0_i32 = arith.constant 0 : i32
    %c0_i32_0 = arith.constant 0 : i32
    %c0_i32_1 = arith.constant 0 : i32
    return %c0_i32, %c0_i32_0 : i32, i32
  }
  func.func @transform_4(%arg0: i32) -> (i32, i32) {
    %c0_i32 = arith.constant 0 : i32
    %c0_i32_0 = arith.constant 0 : i32
    %c0_i32_1 = arith.constant 0 : i32
    return %c0_i32, %c0_i32_0 : i32, i32
  }
  func.func @transform_5(%arg0: i32) -> (i32, i32) {
    %c0_i32 = arith.constant 0 : i32
    %c0_i32_0 = arith.constant 0 : i32
    %c0_i32_1 = arith.constant 0 : i32
    return %c0_i32, %c0_i32_0 : i32, i32
  }
  func.func @transform_6(%arg0: i32) -> (i32, i32, i32) {
    %c0_i32 = arith.constant 0 : i32
    %c0_i32_0 = arith.constant 0 : i32
    %c0_i32_1 = arith.constant 0 : i32
    return %arg0, %c0_i32, %c0_i32_0 : i32, i32, i32
  }
}

</mosaic_0001>

<llo_original>
// kernel: tpu_custom_call.1
$region0: #{tpu_custom_call.1}
  #allocation0 [shape = 'u32[]', space=smem, size = 0x4, offset = 0x4, fixed_abs, tag = 'smem constant byte address 0x4 - core index']
  #allocation1 [shape = 'u32[72,128]{1,0:T(1,128)}', space=vmem, size = 0x9000, scoped, tag = 'internal scratch']
  %s0 = inlined_call_operand.hbm [shape: f32[2,1,8,128], index: 0, kind: input, shape index: {}]
  %s1 = inlined_call_operand.hbm [shape: f32[128,128], index: 1, kind: input, shape index: {}]
  %s2 = inlined_call_operand.hbm [shape: f32[8,128], index: 2, kind: input, shape index: {}]
  %s3 = inlined_call_operand.hbm [shape: f32[128,128], index: 3, kind: input, shape index: {}]
  %s4 = inlined_call_operand.hbm [shape: f32[8,128], index: 4, kind: input, shape index: {}]
  %s5 = inlined_call_operand.vmem [shape: f32[1,128], index: 5, kind: input, shape index: {}]
  %s6 = inlined_call_operand.hbm [shape: s32[2,1,8], index: 6, kind: output, shape index: {}]
  %s7 = sld [smem:[#allocation0]]
  $region77: #{tpu_custom_call.1} parent=0
    _
  %s9 = ssub.s32 1, %s7
  %s10 = scalar_select 0, %s9, %s7
  $region1: #{tpu_custom_call.1} parent=0
    #allocation2 [shape = 'u8[8192]{0}', space=vmem, size = 0x2000, scoped, tag = 'input window, operand 0']
    #allocation3 [shape = 's32[2]{0}', space=sflag, size = 0x8, scoped, tag = 'scoped memory for tpu_custom_call.1']
    #allocation4 [shape = 's32[2]{0}', space=sflag, size = 0x8, scoped, tag = 'scoped memory for tpu_custom_call.1']
    #allocation5 [shape = 'u8[65536]{0}', space=vmem, size = 0x10000, scoped, tag = 'input window, operand 1, single buffered']
    #allocation6 [shape = 's32[1]{0}', space=sflag, size = 0x4, scoped, tag = 'scoped memory for tpu_custom_call.1']
    #allocation7 [shape = 'u8[4096]{0}', space=vmem, size = 0x1000, scoped, tag = 'input window, operand 2, single buffered']
    #allocation8 [shape = 'u8[65536]{0}', space=vmem, size = 0x10000, scoped, tag = 'input window, operand 3, single buffered']
    #allocation9 [shape = 's32[1]{0}', space=sflag, size = 0x4, scoped, tag = 'scoped memory for tpu_custom_call.1']
    #allocation10 [shape = 'u8[4096]{0}', space=vmem, size = 0x1000, scoped, tag = 'input window, operand 4, single buffered']
    #allocation11 [shape = 'u8[1024]{0}', space=vmem, size = 0x400, scoped, tag = 'output window, operand 0']
    %11 = vsyncpa [#allocation3], 0
    %s12 = scalar_lea.sflag [#allocation3], 1
    %13 = vsyncpa %s12, 0
    %14 = vsyncpa [#allocation6], 0
    %15 = vsyncpa [#allocation9], 0
    %16 = vsyncpa [#allocation4], 0
    %s17 = scalar_lea.sflag [#allocation4], 1
    %18 = vsyncpa %s17, 0
    loop: start=0, step=1, limit=4
    $region2: #{tpu_custom_call.1} parent=1 // loop_pre_header
      _
    $region3: #{tpu_custom_call.1} parent=1 // loop_header
      %s20 = sphi 0, %s24
      %p21 = scmp.ge.s32.totalorder %s20, 4
      %s30 = sphi 0, %s32
      %s33 = sphi 0, %s30
      %s34 = sphi 0, %s33
      %s50 = sphi 0, %s34
      %s54 = sphi 0, %s54
      %s56 = sphi 0, %s54
      %s57 = sphi 0, %s56
      %s71 = sphi 0, %s57
      %s75 = sphi 0, %s75
      %s77 = sphi 0, %s75
      %s78 = sphi 0, %s77
      %s92 = sphi 0, %s78
      %s96 = sphi 0, %s96
      %s98 = sphi 0, %s96
      %s99 = sphi 0, %s98
      %s113 = sphi 0, %s99
      %s117 = sphi 0, %s117
      %s119 = sphi 0, %s117
      %s120 = sphi 0, %s119
      %s134 = sphi 0, %s120
      %s138 = sphi 0, %s138
      %s140 = sphi 0, %s138
      %s141 = sphi 0, %s140
      %s155 = sphi 0, %s141
      %s161 = sphi 0, %s163
      %s164 = sphi 0, %s161
      %s165 = sphi 0, %s164
      %s181 = sphi 0, %s165
    $region4: #{tpu_custom_call.1} parent=1 // loop_header_branch
      %23 = sbr.rel (%p21) target = $region8
    $region5: #{tpu_custom_call.1} parent=1 // loop_body
      %s25 = ssub.s32 %s20, 1
      %s26 = ssub.s32 %s20, 2
      %s27 = sadd.s32 %s20, 1
      %s28 = ssub.s32 %s20, %s27
      %p29 = scmp.eq.s32.totalorder %s28, 0
      %s31 = sadd.s32 %s30, 1
      %s32 = scalar_select %p29, %s30, %s31
      %p35 = pneg %p29
      %p36 = scmp.eq.s32.totalorder %s20, 1
      %p37 = por %p35, %p36
      %p38 = scmp.ne.s32.totalorder %s30, %s33
      %p39 = scmp.eq.s32.totalorder %s20, 0
      %p40 = por %p38, %p39
      %p41 = scmp.ne.s32.totalorder %s30, %s33
      %p42 = scmp.eq.s32.totalorder %s25, 1
      %p43 = por %p41, %p42
      %p44 = scmp.ne.s32.totalorder %s33, %s34
      %p45 = scmp.eq.s32.totalorder %s25, 0
      %p46 = por %p44, %p45
      %p47 = scmp.ne.s32.totalorder %s33, %s34
      %p48 = scmp.eq.s32.totalorder %s26, 1
      %p49 = por %p47, %p48
      %p51 = scmp.ne.s32.totalorder %s34, %s50
      %p52 = scmp.eq.s32.totalorder %s26, 0
      %p53 = por %p51, %p52
      %s55 = sadd.s32 %s54, 1
      %p58 = scmp.eq.s32.totalorder %s20, 1
      %p59 = scmp.ne.s32.totalorder %s54, %s56
      %p60 = scmp.eq.s32.totalorder %s20, 0
      %p61 = por %p59, %p60
      %p62 = scmp.ne.s32.totalorder %s54, %s56
      %p63 = scmp.eq.s32.totalorder %s25, 1
      %p64 = por %p62, %p63
      %p65 = scmp.ne.s32.totalorder %s56, %s57
      %p66 = scmp.eq.s32.totalorder %s25, 0
      %p67 = por %p65, %p66
      %p68 = scmp.ne.s32.totalorder %s56, %s57
      %p69 = scmp.eq.s32.totalorder %s26, 1
      %p70 = por %p68, %p69
      %p72 = scmp.ne.s32.totalorder %s57, %s71
      %p73 = scmp.eq.s32.totalorder %s26, 0
      %p74 = por %p72, %p73
      %s76 = sadd.s32 %s75, 1
      %p79 = scmp.eq.s32.totalorder %s20, 1
      %p80 = scmp.ne.s32.totalorder %s75, %s77
      %p81 = scmp.eq.s32.totalorder %s20, 0
      %p82 = por %p80, %p81
      %p83 = scmp.ne.s32.totalorder %s75, %s77
      %p84 = scmp.eq.s32.totalorder %s25, 1
      %p85 = por %p83, %p84
      %p86 = scmp.ne.s32.totalorder %s77, %s78
      %p87 = scmp.eq.s32.totalorder %s25, 0
      %p88 = por %p86, %p87
      %p89 = scmp.ne.s32.totalorder %s77, %s78
      %p90 = scmp.eq.s32.totalorder %s26, 1
      %p91 = por %p89, %p90
      %p93 = scmp.ne.s32.totalorder %s78, %s92
      %p94 = scmp.eq.s32.totalorder %s26, 0
      %p95 = por %p93, %p94
      %s97 = sadd.s32 %s96, 1
      %p100 = scmp.eq.s32.totalorder %s20, 1
      %p101 = scmp.ne.s32.totalorder %s96, %s98
      %p102 = scmp.eq.s32.totalorder %s20, 0
      %p103 = por %p101, %p102
      %p104 = scmp.ne.s32.totalorder %s96, %s98
      %p105 = scmp.eq.s32.totalorder %s25, 1
      %p106 = por %p104, %p105
      %p107 = scmp.ne.s32.totalorder %s98, %s99
      %p108 = scmp.eq.s32.totalorder %s25, 0
      %p109 = por %p107, %p108
      %p110 = scmp.ne.s32.totalorder %s98, %s99
      %p111 = scmp.eq.s32.totalorder %s26, 1
      %p112 = por %p110, %p111
      %p114 = scmp.ne.s32.totalorder %s99, %s113
      %p115 = scmp.eq.s32.totalorder %s26, 0
      %p116 = por %p114, %p115
      %s118 = sadd.s32 %s117, 1
      %p121 = scmp.eq.s32.totalorder %s20, 1
      %p122 = scmp.ne.s32.totalorder %s117, %s119
      %p123 = scmp.eq.s32.totalorder %s20, 0
      %p124 = por %p122, %p123
      %p125 = scmp.ne.s32.totalorder %s117, %s119
      %p126 = scmp.eq.s32.totalorder %s25, 1
      %p127 = por %p125, %p126
      %p128 = scmp.ne.s32.totalorder %s119, %s120
      %p129 = scmp.eq.s32.totalorder %s25, 0
      %p130 = por %p128, %p129
      %p131 = scmp.ne.s32.totalorder %s119, %s120
      %p132 = scmp.eq.s32.totalorder %s26, 1
      %p133 = por %p131, %p132
      %p135 = scmp.ne.s32.totalorder %s120, %s134
      %p136 = scmp.eq.s32.totalorder %s26, 0
      %p137 = por %p135, %p136
      %s139 = sadd.s32 %s138, 1
      %p142 = scmp.eq.s32.totalorder %s20, 1
      %p143 = scmp.ne.s32.totalorder %s138, %s140
      %p144 = scmp.eq.s32.totalorder %s20, 0
      %p145 = por %p143, %p144
      %p146 = scmp.ne.s32.totalorder %s138, %s140
      %p147 = scmp.eq.s32.totalorder %s25, 1
      %p148 = por %p146, %p147
      %p149 = scmp.ne.s32.totalorder %s140, %s141
      %p150 = scmp.eq.s32.totalorder %s25, 0
      %p151 = por %p149, %p150
      %p152 = scmp.ne.s32.totalorder %s140, %s141
      %p153 = scmp.eq.s32.totalorder %s26, 1
      %p154 = por %p152, %p153
      %p156 = scmp.ne.s32.totalorder %s141, %s155
      %p157 = scmp.eq.s32.totalorder %s26, 0
      %p158 = por %p156, %p157
      %s159 = ssub.s32 %s20, %s27
      %p160 = scmp.eq.s32.totalorder %s159, 0
      %s162 = sadd.s32 %s161, 1
      %s163 = scalar_select %p160, %s161, %s162
      %p166 = pneg %p160
      %p167 = scmp.eq.s32.totalorder %s20, 1
      %p168 = por %p166, %p167
      %p169 = scmp.ne.s32.totalorder %s161, %s164
      %p170 = scmp.eq.s32.totalorder %s20, 0
      %p171 = por %p169, %p170
      %p172 = scmp.ne.s32.totalorder %s161, %s164
      %p173 = scmp.eq.s32.totalorder %s25, 1
      %p174 = por %p172, %p173
      %p175 = scmp.ne.s32.totalorder %s164, %s165
      %p176 = scmp.eq.s32.totalorder %s25, 0
      %p177 = por %p175, %p176
      %p178 = scmp.ne.s32.totalorder %s164, %s165
      %p179 = scmp.eq.s32.totalorder %s26, 1
      %p180 = por %p178, %p179
      %p182 = scmp.ne.s32.totalorder %s165, %s181
      %p183 = scmp.eq.s32.totalorder %s26, 0
      %p184 = por %p182, %p183
      %p185 = scmp.le.s32.totalorder 1, %s20
      %p186 = scmp.lt.s32.totalorder %s20, 3
      %p187 = pnand %p185, %p186
      %p188 = pneg %p187
      // Predicated region
      $region9: #{tpu_custom_call.1} parent=5 // pred_check
        _
      $region10: #{tpu_custom_call.1} parent=5 // pred_check_branch
        %190 = sbr.rel (%p187) target = $region12
      $region11: #{tpu_custom_call.1} parent=5 // pred_region
        %s191 = ssub.s32 %s20, 1
        // Predicated region
        $region13: #{tpu_custom_call.1} parent=11 // pred_check
          %p192 = pneg %p67
        $region14: #{tpu_custom_call.1} parent=11 // pred_check_branch
          %194 = sbr.rel (%p192) target = $region16
        $region15: #{tpu_custom_call.1} parent=11 // pred_region
          %196 = vsyncadd [#allocation6], 0
          %s197 = sshll.u32 %s1, 4
          %s198 = int_to_ptr.hbm [resolvable:$true] %s197
          %s199 = sshll.u32 [#allocation5], 4
          %s200 = int_to_ptr.vmem [resolvable:$true] %s199
          %205 = dma.hbm_to_vmem [thread:$0]  %s198, 2048, %s200, [#allocation6], 128, 128, 8
        $region16: #{tpu_custom_call.1} parent=11 // pred_fallthru
          _
        // Predicated region
        $region17: #{tpu_custom_call.1} parent=11 // pred_check
          %p206 = pneg %p88
        $region18: #{tpu_custom_call.1} parent=11 // pred_check_branch
          %208 = sbr.rel (%p206) target = $region20
        $region19: #{tpu_custom_call.1} parent=11 // pred_region
          %210 = vsyncadd [#allocation6], 0
          %s212 = sshll.u32 %s2, 4
          %s213 = int_to_ptr.hbm [resolvable:$true] %s212
          %s214 = sshll.u32 [#allocation7], 4
          %s215 = int_to_ptr.vmem [resolvable:$true] %s214
          %217 = dma.hbm_to_vmem [thread:$0]  %s213, 128, %s215, [#allocation6]
        $region20: #{tpu_custom_call.1} parent=11 // pred_fallthru
          _
        // Predicated region
        $region21: #{tpu_custom_call.1} parent=11 // pred_check
          %p218 = pneg %p109
        $region22: #{tpu_custom_call.1} parent=11 // pred_check_branch
          %220 = sbr.rel (%p218) target = $region24
        $region23: #{tpu_custom_call.1} parent=11 // pred_region
          %222 = vsyncadd [#allocation9], 0
          %s223 = sshll.u32 %s3, 4
          %s224 = int_to_ptr.hbm [resolvable:$true] %s223
          %s225 = sshll.u32 [#allocation8], 4
          %s226 = int_to_ptr.vmem [resolvable:$true] %s225
          %231 = dma.hbm_to_vmem [thread:$0]  %s224, 2048, %s226, [#allocation9], 128, 128, 8
        $region24: #{tpu_custom_call.1} parent=11 // pred_fallthru
          _
        // Predicated region
        $region25: #{tpu_custom_call.1} parent=11 // pred_check
          %p232 = pneg %p130
        $region26: #{tpu_custom_call.1} parent=11 // pred_check_branch
          %234 = sbr.rel (%p232) target = $region28
        $region27: #{tpu_custom_call.1} parent=11 // pred_region
          %236 = vsyncadd [#allocation9], 0
          %s238 = sshll.u32 %s4, 4
          %s239 = int_to_ptr.hbm [resolvable:$true] %s238
          %s240 = sshll.u32 [#allocation10], 4
          %s241 = int_to_ptr.vmem [resolvable:$true] %s240
          %243 = dma.hbm_to_vmem [thread:$0]  %s239, 128, %s241, [#allocation9]
        $region28: #{tpu_custom_call.1} parent=11 // pred_fallthru
          _
        // Predicated region
        $region29: #{tpu_custom_call.1} parent=11 // pred_check
          %p244 = pneg %p151
        $region30: #{tpu_custom_call.1} parent=11 // pred_check_branch
          %246 = sbr.rel (%p244) target = $region32
        $region31: #{tpu_custom_call.1} parent=11 // pred_region
          _
        $region32: #{tpu_custom_call.1} parent=11 // pred_fallthru
          _
      $region12: #{tpu_custom_call.1} parent=5 // pred_fallthru
        _
      %p247 = scmp.lt.s32.totalorder %s20, 2
      // Predicated region
      $region33: #{tpu_custom_call.1} parent=5 // pred_check
        %p248 = pneg %p247
      $region34: #{tpu_custom_call.1} parent=5 // pred_check_branch
        %250 = sbr.rel (%p248) target = $region36
      $region35: #{tpu_custom_call.1} parent=5 // pred_region
        // Predicated region
        $region37: #{tpu_custom_call.1} parent=35 // pred_check
          %p251 = pneg %p40
        $region38: #{tpu_custom_call.1} parent=35 // pred_check_branch
          %253 = sbr.rel (%p251) target = $region40
        $region39: #{tpu_custom_call.1} parent=35 // pred_region
          %s254 = sand.u32 %s30, 1
          %s255 = scalar_lea.sflag [#allocation3], %s254
          %s256 = sand.u32 %s30, 1
          %s257 = smul.addr %s256, 8
          %s258 = scalar_lea.vmem [#allocation2], %s257
          %260 = vsyncadd %s255, 0
          %s261 = smul.addr %s20, 8
          %s262 = scalar_lea.hbm %s0, %s261
          %s264 = sshll.u32 %s262, 4
          %s265 = int_to_ptr.hbm [resolvable:$true] %s264
          %s266 = sshll.u32 %s258, 4
          %s267 = int_to_ptr.vmem [resolvable:$true] %s266
          %269 = dma.hbm_to_vmem [thread:$0]  %s265, 128, %s267, %s255
        $region40: #{tpu_custom_call.1} parent=35 // pred_fallthru
          _
      $region36: #{tpu_custom_call.1} parent=5 // pred_fallthru
        _
      %p270 = scmp.le.s32.totalorder 1, %s20
      %p271 = scmp.lt.s32.totalorder %s20, 3
      %p272 = pnand %p270, %p271
      %p273 = pneg %p272
      // Predicated region
      $region41: #{tpu_custom_call.1} parent=5 // pred_check
        _
      $region42: #{tpu_custom_call.1} parent=5 // pred_check_branch
        %275 = sbr.rel (%p272) target = $region44
      $region43: #{tpu_custom_call.1} parent=5 // pred_region
        %s276 = ssub.s32 %s20, 1
        %s277 = sand.u32 %s33, 1
        %s278 = scalar_lea.sflag [#allocation3], %s277
        %s279 = sand.u32 %s33, 1
        %s280 = smul.addr %s279, 8
        %s281 = scalar_lea.vmem [#allocation2], %s280
        // Predicated region
        $region45: #{tpu_custom_call.1} parent=43 // pred_check
          %p282 = pneg %p46
        $region46: #{tpu_custom_call.1} parent=43 // pred_check_branch
          %284 = sbr.rel (%p282) target = $region48
        $region47: #{tpu_custom_call.1} parent=43 // pred_region
          %286 = dma.done %s278, 128
        $region48: #{tpu_custom_call.1} parent=43 // pred_fallthru
          _
        // Predicated region
        $region49: #{tpu_custom_call.1} parent=43 // pred_check
          %p287 = pneg %p67
        $region50: #{tpu_custom_call.1} parent=43 // pred_check_branch
          %289 = sbr.rel (%p287) target = $region52
        $region51: #{tpu_custom_call.1} parent=43 // pred_region
          %291 = dma.done [#allocation6], 2048
        $region52: #{tpu_custom_call.1} parent=43 // pred_fallthru
          _
        // Predicated region
        $region53: #{tpu_custom_call.1} parent=43 // pred_check
          %p292 = pneg %p88
        $region54: #{tpu_custom_call.1} parent=43 // pred_check_branch
          %294 = sbr.rel (%p292) target = $region56
        $region55: #{tpu_custom_call.1} parent=43 // pred_region
          %296 = dma.done [#allocation6], 128
        $region56: #{tpu_custom_call.1} parent=43 // pred_fallthru
          _
        // Predicated region
        $region57: #{tpu_custom_call.1} parent=43 // pred_check
          %p297 = pneg %p109
        $region58: #{tpu_custom_call.1} parent=43 // pred_check_branch
          %299 = sbr.rel (%p297) target = $region60
        $region59: #{tpu_custom_call.1} parent=43 // pred_region
          %301 = dma.done [#allocation9], 2048
        $region60: #{tpu_custom_call.1} parent=43 // pred_fallthru
          _
        // Predicated region
        $region61: #{tpu_custom_call.1} parent=43 // pred_check
          %p302 = pneg %p130
        $region62: #{tpu_custom_call.1} parent=43 // pred_check_branch
          %304 = sbr.rel (%p302) target = $region64
        $region63: #{tpu_custom_call.1} parent=43 // pred_region
          %306 = dma.done [#allocation9], 128
        $region64: #{tpu_custom_call.1} parent=43 // pred_fallthru
          _
        %s307 = sand.u32 %s33, 1
        %s308 = scalar_lea.sflag [#allocation3], %s307
        %s309 = sand.u32 %s33, 1
        %s310 = smul.addr %s309, 8
        %s311 = scalar_lea.vmem [#allocation2], %s310
        %p312 = pneg %p46
        %p313 = pneg %p43
        %p314 = pneg %p67
        %p315 = pneg %p64
        %p316 = pneg %p88
        %p317 = pneg %p85
        %p318 = pneg %p109
        %p319 = pneg %p106
        %p320 = pneg %p130
        %p321 = pneg %p127
        %p322 = pneg %p151
        %p323 = pneg %p148
        %p324 = pneg %p177
        %p325 = pneg %p174
        %s326 = sand.u32 %s164, 1
        %s327 = scalar_lea.sflag [#allocation4], %s326
        %s328 = sand.u32 %s164, 1
        %s329 = scalar_lea.vmem [#allocation11], %s328
        %v330 = vld [vmem:[#allocation5] sm:$0xff]
        %v331 = vld [vmem:[#allocation5 + $0x8] sm:$0xff]
        %v332 = vld [vmem:[#allocation5 + $0x10] sm:$0xff]
        %v333 = vld [vmem:[#allocation5 + $0x18] sm:$0xff]
        %v334 = vld [vmem:[#allocation5 + $0x20] sm:$0xff]
        %v335 = vld [vmem:[#allocation5 + $0x28] sm:$0xff]
        %v336 = vld [vmem:[#allocation5 + $0x30] sm:$0xff]
        %v337 = vld [vmem:[#allocation5 + $0x38] sm:$0xff]
        %v338 = vld [vmem:[#allocation5 + $0x40] sm:$0xff]
        %v339 = vld [vmem:[#allocation5 + $0x48] sm:$0xff]
        %v340 = vld [vmem:[#allocation5 + $0x50] sm:$0xff]
        %v341 = vld [vmem:[#allocation5 + $0x58] sm:$0xff]
        %v342 = vld [vmem:[#allocation5 + $0x60] sm:$0xff]
        %v343 = vld [vmem:[#allocation5 + $0x68] sm:$0xff]
        %v344 = vld [vmem:[#allocation5 + $0x70] sm:$0xff]
        %v345 = vld [vmem:[#allocation5 + $0x78] sm:$0xff]
        %v346 = vld [vmem:[#allocation7] sm:$0xff]
        %v347 = vld [vmem:[#allocation8] sm:$0xff]
        %v348 = vld [vmem:[#allocation8 + $0x8] sm:$0xff]
        %v349 = vld [vmem:[#allocation8 + $0x10] sm:$0xff]
        %v350 = vld [vmem:[#allocation8 + $0x18] sm:$0xff]
        %v351 = vld [vmem:[#allocation8 + $0x20] sm:$0xff]
        %v352 = vld [vmem:[#allocation8 + $0x28] sm:$0xff]
        %v353 = vld [vmem:[#allocation8 + $0x30] sm:$0xff]
        %v354 = vld [vmem:[#allocation8 + $0x38] sm:$0xff]
        %v355 = vld [vmem:[#allocation8 + $0x40] sm:$0xff]
        %v356 = vld [vmem:[#allocation8 + $0x48] sm:$0xff]
        %v357 = vld [vmem:[#allocation8 + $0x50] sm:$0xff]
        %v358 = vld [vmem:[#allocation8 + $0x58] sm:$0xff]
        %v359 = vld [vmem:[#allocation8 + $0x60] sm:$0xff]
        %v360 = vld [vmem:[#allocation8 + $0x68] sm:$0xff]
        %v361 = vld [vmem:[#allocation8 + $0x70] sm:$0xff]
        %v362 = vld [vmem:[#allocation8 + $0x78] sm:$0xff]
        %v363 = vld [vmem:[#allocation10] sm:$0xff]
        %v364 = vld [vmem:[%s5] sm:$0x1]
        %v365 = vlaneseq
        %v366 = vand.u32 %v365, 127
        %v367 = vld [vmem:[%s281] sm:$0xff]
        %368 = vmatpush.msra.mxu0 %v345
        %369 = vmatpush.msra.mxu0 %v344
        %370 = vmatpush.msra.mxu0 %v343
        %371 = vmatpush.msra.mxu0 %v342
        %372 = vmatpush.msra.mxu0 %v341
        %373 = vmatpush.msra.mxu0 %v340
        %374 = vmatpush.msra.mxu0 %v339
        %375 = vmatpush.msra.mxu0 %v338
        %376 = vmatpush.msra.mxu0 %v337
        %377 = vmatpush.msra.mxu0 %v336
        %378 = vmatpush.msra.mxu0 %v335
        %379 = vmatpush.msra.mxu0 %v334
        %380 = vmatpush.msra.mxu0 %v333
        %381 = vmatpush.msra.mxu0 %v332
        %382 = vmatpush.msra.mxu0 %v331
        %383 = vmatpush.msra.mxu0 %v330
        %384 = vmatmul.f32.gmra.mxu0 %v367
        %v385 = vpop.f32.mrf.mxu0
        %v386 = vadd.f32 0.0, %v385
        %387 = vdwg.mxu0
        %vm388 = vcmp.gt.f32.partialorder %v364, 0.5
        %v389 = vsel %vm388, %v386, -10000.0
        %v391 = vperm.slane %v389, 0
        %v393 = vmul.f32 %v363, %v391
        %394 = vadd.xlane.f32.xlu0 %v393
        %v395 = vpop.xlane.xlu0 %394
        %v396 = vadd.f32 %v346, %v395
        %v397 = vrot.slane %v396, 4
        %v398 = vmax.f32 %v396, %v397
        %v399 = vrot.slane %v398, 2
        %v400 = vmax.f32 %v398, %v399
        %v401 = vrot.slane %v400, 1
        %v402 = vmax.f32 %v400, %v401
        %v403 = vadd.f32 %v402, %v386
        %v404 = vperm.slane %v403, 1
        %v405 = vmul.f32 %v363, %v404
        %406 = vadd.xlane.f32.xlu0 %v405
        %v407 = vpop.xlane.xlu0 %406
        %v408 = vadd.f32 %v346, %v407
        %v409 = vrot.slane %v408, 4
        %v410 = vmax.f32 %v408, %v409
        %v411 = vrot.slane %v410, 2
        %v412 = vmax.f32 %v410, %v411
        %v413 = vrot.slane %v412, 1
        %v414 = vmax.f32 %v412, %v413
        %v415 = vadd.f32 %v414, %v386
        %v416 = vperm.slane %v415, 2
        %v417 = vmul.f32 %v363, %v416
        %418 = vadd.xlane.f32.xlu0 %v417
        %v419 = vpop.xlane.xlu0 %418
        %v420 = vadd.f32 %v346, %v419
        %v421 = vrot.slane %v420, 4
        %v422 = vmax.f32 %v420, %v421
        %v423 = vrot.slane %v422, 2
        %v424 = vmax.f32 %v422, %v423
        %v425 = vrot.slane %v424, 1
        %v426 = vmax.f32 %v424, %v425
        %v427 = vadd.f32 %v426, %v386
        %v428 = vperm.slane %v427, 3
        %v429 = vmul.f32 %v363, %v428
        %430 = vadd.xlane.f32.xlu0 %v429
        %v431 = vpop.xlane.xlu0 %430
        %v432 = vadd.f32 %v346, %v431
        %v433 = vrot.slane %v432, 4
        %v434 = vmax.f32 %v432, %v433
        %v435 = vrot.slane %v434, 2
        %v436 = vmax.f32 %v434, %v435
        %v437 = vrot.slane %v436, 1
        %v438 = vmax.f32 %v436, %v437
        %v439 = vadd.f32 %v438, %v386
        %v440 = vperm.slane %v439, 4
        %v441 = vmul.f32 %v363, %v440
        %442 = vadd.xlane.f32.xlu0 %v441
        %v443 = vpop.xlane.xlu0 %442
        %v444 = vadd.f32 %v346, %v443
        %v445 = vrot.slane %v444, 4
        %v446 = vmax.f32 %v444, %v445
        %v447 = vrot.slane %v446, 2
        %v448 = vmax.f32 %v446, %v447
        %v449 = vrot.slane %v448, 1
        %v450 = vmax.f32 %v448, %v449
        %v451 = vadd.f32 %v450, %v386
        %v452 = vperm.slane %v451, 5
        %v453 = vmul.f32 %v363, %v452
        %454 = vadd.xlane.f32.xlu0 %v453
        %v455 = vpop.xlane.xlu0 %454
        %v456 = vadd.f32 %v346, %v455
        %v457 = vrot.slane %v456, 4
        %v458 = vmax.f32 %v456, %v457
        %v459 = vrot.slane %v458, 2
        %v460 = vmax.f32 %v458, %v459
        %v461 = vrot.slane %v460, 1
        %v462 = vmax.f32 %v460, %v461
        %v463 = vadd.f32 %v462, %v386
        %v464 = vperm.slane %v463, 6
        %v465 = vmul.f32 %v363, %v464
        %466 = vadd.xlane.f32.xlu0 %v465
        %v467 = vpop.xlane.xlu0 %466
        %v468 = vadd.f32 %v346, %v467
        %v469 = vrot.slane %v468, 4
        %v470 = vmax.f32 %v468, %v469
        %v471 = vrot.slane %v470, 2
        %v472 = vmax.f32 %v470, %v471
        %v473 = vrot.slane %v472, 1
        %v474 = vmax.f32 %v472, %v473
        %v475 = vadd.f32 %v474, %v386
        %vm476 = vcmask 1047559
        %v477 = vsel %vm476, %v475, -inf
        %478 = vmax.xlane.f32.xlu0 %v477
        %v479 = vpop.xlane.xlu0 %478
        %vm480 = vcmp.eq.f32.partialorder %v475, %v479
        %v481 = vsel %vm480, %v366, 128
        %v482 = vsel %vm476, %v481, 2147483647
        %v483 = vand.u32 %v482, 65535
        %v484 = vshra.s32 %v482, 16
        %v485 = vcvt.s32.f32 %v483
        %v486 = vcvt.s32.f32 %v484
        %487 = vmin.xlane.f32.xlu0 %v486
        %v488 = vpop.xlane.xlu0 %487
        %vm489 = vcmp.eq.f32.partialorder %v486, %v488
        %v490 = vsel %vm489, %v485, inf
        %491 = vmin.xlane.f32.xlu0 %v490
        %v492 = vpop.xlane.xlu0 %491
        %v493 = vcvt.f32.s32 %v492
        %v494 = vcvt.f32.s32 %v488
        %v495 = vshll.u32 %v494, 16
        %v496 = vadd.s32 %v495, %v493
        %vm497 = vcmp.eq.s32.totalorder %v366, 7
        %v498 = vsel %vm497, %v496, 0
        %vm499 = vcmp.eq.s32.totalorder %v366, %v496
        %v500 = vsel %vm499, 1.0, 0.0
        %v502 = vrot.slane %v500, 7
        %504 = vmatpush.msra.mxu0 %v362
        %505 = vmatpush.msra.mxu0 %v361
        %506 = vmatpush.msra.mxu0 %v360
        %507 = vmatpush.msra.mxu0 %v359
        %508 = vmatpush.msra.mxu0 %v358
        %509 = vmatpush.msra.mxu0 %v357
        %510 = vmatpush.msra.mxu0 %v356
        %511 = vmatpush.msra.mxu0 %v355
        %512 = vmatpush.msra.mxu0 %v354
        %513 = vmatpush.msra.mxu0 %v353
        %514 = vmatpush.msra.mxu0 %v352
        %515 = vmatpush.msra.mxu0 %v351
        %516 = vmatpush.msra.mxu0 %v350
        %517 = vmatpush.msra.mxu0 %v349
        %518 = vmatpush.msra.mxu0 %v348
        %519 = vmatpush.msra.mxu0 %v347
        %520 = vmatmul.f32.gmra.mxu0 %v502
        %v521 = vpop.f32.mrf.mxu0
        %v522 = vadd.f32 0.0, %v521
        %523 = vdwg.mxu0
        %v525 = vrot.slane %v522, 2
        %v527 = vadd.f32 %v463, %v525
        %vm528 = vcmask 1046534
        %v529 = vsel %vm528, %v527, -inf
        %530 = vmax.xlane.f32.xlu0 %v529
        %v531 = vpop.xlane.xlu0 %530
        %vm532 = vcmp.eq.f32.partialorder %v527, %v531
        %v533 = vsel %vm532, %v366, 128
        %v534 = vsel %vm528, %v533, 2147483647
        %v535 = vand.u32 %v534, 65535
        %v536 = vshra.s32 %v534, 16
        %v537 = vcvt.s32.f32 %v535
        %v538 = vcvt.s32.f32 %v536
        %539 = vmin.xlane.f32.xlu0 %v538
        %v540 = vpop.xlane.xlu0 %539
        %vm541 = vcmp.eq.f32.partialorder %v538, %v540
        %v542 = vsel %vm541, %v537, inf
        %543 = vmin.xlane.f32.xlu0 %v542
        %v544 = vpop.xlane.xlu0 %543
        %v545 = vcvt.f32.s32 %v544
        %v546 = vcvt.f32.s32 %v540
        %v547 = vshll.u32 %v546, 16
        %v548 = vadd.s32 %v547, %v545
        %vm549 = vcmp.eq.s32.totalorder %v366, 6
        %v550 = vsel %vm549, %v548, 0
        %v551 = vrot.slane %v550, 7
        %v552 = vadd.s32 %v498, %v551
        %vm553 = vcmp.eq.s32.totalorder %v366, %v548
        %v554 = vsel %vm553, 1.0, 0.0
        %v556 = vrot.slane %v554, 6
        %558 = vmatpush.msra.mxu0 %v362
        %559 = vmatpush.msra.mxu0 %v361
        %560 = vmatpush.msra.mxu0 %v360
        %561 = vmatpush.msra.mxu0 %v359
        %562 = vmatpush.msra.mxu0 %v358
        %563 = vmatpush.msra.mxu0 %v357
        %564 = vmatpush.msra.mxu0 %v356
        %565 = vmatpush.msra.mxu0 %v355
        %566 = vmatpush.msra.mxu0 %v354
        %567 = vmatpush.msra.mxu0 %v353
        %568 = vmatpush.msra.mxu0 %v352
        %569 = vmatpush.msra.mxu0 %v351
        %570 = vmatpush.msra.mxu0 %v350
        %571 = vmatpush.msra.mxu0 %v349
        %572 = vmatpush.msra.mxu0 %v348
        %573 = vmatpush.msra.mxu0 %v347
        %574 = vmatmul.f32.gmra.mxu0 %v556
        %v575 = vpop.f32.mrf.mxu0
        %v576 = vadd.f32 0.0, %v575
        %577 = vdwg.mxu0
        %v579 = vrot.slane %v576, 3
        %v581 = vadd.f32 %v451, %v579
        %vm582 = vcmask 1045509
        %v583 = vsel %vm582, %v581, -inf
        %584 = vmax.xlane.f32.xlu0 %v583
        %v585 = vpop.xlane.xlu0 %584
        %vm586 = vcmp.eq.f32.partialorder %v581, %v585
        %v587 = vsel %vm586, %v366, 128
        %v588 = vsel %vm582, %v587, 2147483647
        %v589 = vand.u32 %v588, 65535
        %v590 = vshra.s32 %v588, 16
        %v591 = vcvt.s32.f32 %v589
        %v592 = vcvt.s32.f32 %v590
        %593 = vmin.xlane.f32.xlu0 %v592
        %v594 = vpop.xlane.xlu0 %593
        %vm595 = vcmp.eq.f32.partialorder %v592, %v594
        %v596 = vsel %vm595, %v591, inf
        %597 = vmin.xlane.f32.xlu0 %v596
        %v598 = vpop.xlane.xlu0 %597
        %v599 = vcvt.f32.s32 %v598
        %v600 = vcvt.f32.s32 %v594
        %v601 = vshll.u32 %v600, 16
        %v602 = vadd.s32 %v601, %v599
        %vm603 = vcmp.eq.s32.totalorder %v366, 5
        %v604 = vsel %vm603, %v602, 0
        %v605 = vrot.slane %v604, 6
        %v606 = vadd.s32 %v552, %v605
        %vm607 = vcmp.eq.s32.totalorder %v366, %v602
        %v608 = vsel %vm607, 1.0, 0.0
        %v610 = vrot.slane %v608, 5
        %612 = vmatpush.msra.mxu0 %v362
        %613 = vmatpush.msra.mxu0 %v361
        %614 = vmatpush.msra.mxu0 %v360
        %615 = vmatpush.msra.mxu0 %v359
        %616 = vmatpush.msra.mxu0 %v358
        %617 = vmatpush.msra.mxu0 %v357
        %618 = vmatpush.msra.mxu0 %v356
        %619 = vmatpush.msra.mxu0 %v355
        %620 = vmatpush.msra.mxu0 %v354
        %621 = vmatpush.msra.mxu0 %v353
        %622 = vmatpush.msra.mxu0 %v352
        %623 = vmatpush.msra.mxu0 %v351
        %624 = vmatpush.msra.mxu0 %v350
        %625 = vmatpush.msra.mxu0 %v349
        %626 = vmatpush.msra.mxu0 %v348
        %627 = vmatpush.msra.mxu0 %v347
        %628 = vmatmul.f32.gmra.mxu0 %v610
        %v629 = vpop.f32.mrf.mxu0
        %v630 = vadd.f32 0.0, %v629
        %631 = vdwg.mxu0
        %v633 = vrot.slane %v630, 4
        %v635 = vadd.f32 %v439, %v633
        %vm636 = vcmask 1044484
        %v637 = vsel %vm636, %v635, -inf
        %638 = vmax.xlane.f32.xlu0 %v637
        %v639 = vpop.xlane.xlu0 %638
        %vm640 = vcmp.eq.f32.partialorder %v635, %v639
        %v641 = vsel %vm640, %v366, 128
        %v642 = vsel %vm636, %v641, 2147483647
        %v643 = vand.u32 %v642, 65535
        %v644 = vshra.s32 %v642, 16
        %v645 = vcvt.s32.f32 %v643
        %v646 = vcvt.s32.f32 %v644
        %647 = vmin.xlane.f32.xlu0 %v646
        %v648 = vpop.xlane.xlu0 %647
        %vm649 = vcmp.eq.f32.partialorder %v646, %v648
        %v650 = vsel %vm649, %v645, inf
        %651 = vmin.xlane.f32.xlu0 %v650
        %v652 = vpop.xlane.xlu0 %651
        %v653 = vcvt.f32.s32 %v652
        %v654 = vcvt.f32.s32 %v648
        %v655 = vshll.u32 %v654, 16
        %v656 = vadd.s32 %v655, %v653
        %vm657 = vcmp.eq.s32.totalorder %v366, 4
        %v658 = vsel %vm657, %v656, 0
        %v659 = vrot.slane %v658, 5
        %v660 = vadd.s32 %v606, %v659
        %vm661 = vcmp.eq.s32.totalorder %v366, %v656
        %v662 = vsel %vm661, 1.0, 0.0
        %v664 = vrot.slane %v662, 4
        %666 = vmatpush.msra.mxu0 %v362
        %667 = vmatpush.msra.mxu0 %v361
        %668 = vmatpush.msra.mxu0 %v360
        %669 = vmatpush.msra.mxu0 %v359
        %670 = vmatpush.msra.mxu0 %v358
        %671 = vmatpush.msra.mxu0 %v357
        %672 = vmatpush.msra.mxu0 %v356
        %673 = vmatpush.msra.mxu0 %v355
        %674 = vmatpush.msra.mxu0 %v354
        %675 = vmatpush.msra.mxu0 %v353
        %676 = vmatpush.msra.mxu0 %v352
        %677 = vmatpush.msra.mxu0 %v351
        %678 = vmatpush.msra.mxu0 %v350
        %679 = vmatpush.msra.mxu0 %v349
        %680 = vmatpush.msra.mxu0 %v348
        %681 = vmatpush.msra.mxu0 %v347
        %682 = vmatmul.f32.gmra.mxu0 %v664
        %v683 = vpop.f32.mrf.mxu0
        %v684 = vadd.f32 0.0, %v683
        %685 = vdwg.mxu0
        %v687 = vrot.slane %v684, 5
        %v689 = vadd.f32 %v427, %v687
        %vm690 = vcmask 1043459
        %v691 = vsel %vm690, %v689, -inf
        %692 = vmax.xlane.f32.xlu0 %v691
        %v693 = vpop.xlane.xlu0 %692
        %vm694 = vcmp.eq.f32.partialorder %v689, %v693
        %v695 = vsel %vm694, %v366, 128
        %v696 = vsel %vm690, %v695, 2147483647
        %v697 = vand.u32 %v696, 65535
        %v698 = vshra.s32 %v696, 16
        %v699 = vcvt.s32.f32 %v697
        %v700 = vcvt.s32.f32 %v698
        %701 = vmin.xlane.f32.xlu0 %v700
        %v702 = vpop.xlane.xlu0 %701
        %vm703 = vcmp.eq.f32.partialorder %v700, %v702
        %v704 = vsel %vm703, %v699, inf
        %705 = vmin.xlane.f32.xlu0 %v704
        %v706 = vpop.xlane.xlu0 %705
        %v707 = vcvt.f32.s32 %v706
        %v708 = vcvt.f32.s32 %v702
        %v709 = vshll.u32 %v708, 16
        %v710 = vadd.s32 %v709, %v707
        %vm711 = vcmp.eq.s32.totalorder %v366, 3
        %v712 = vsel %vm711, %v710, 0
        %v713 = vrot.slane %v712, 4
        %v714 = vadd.s32 %v660, %v713
        %vm715 = vcmp.eq.s32.totalorder %v366, %v710
        %v716 = vsel %vm715, 1.0, 0.0
        %v718 = vrot.slane %v716, 3
        %720 = vmatpush.msra.mxu0 %v362
        %721 = vmatpush.msra.mxu0 %v361
        %722 = vmatpush.msra.mxu0 %v360
        %723 = vmatpush.msra.mxu0 %v359
        %724 = vmatpush.msra.mxu0 %v358
        %725 = vmatpush.msra.mxu0 %v357
        %726 = vmatpush.msra.mxu0 %v356
        %727 = vmatpush.msra.mxu0 %v355
        %728 = vmatpush.msra.mxu0 %v354
        %729 = vmatpush.msra.mxu0 %v353
        %730 = vmatpush.msra.mxu0 %v352
        %731 = vmatpush.msra.mxu0 %v351
        %732 = vmatpush.msra.mxu0 %v350
        %733 = vmatpush.msra.mxu0 %v349
        %734 = vmatpush.msra.mxu0 %v348
        %735 = vmatpush.msra.mxu0 %v347
        %736 = vmatmul.f32.gmra.mxu0 %v718
        %v737 = vpop.f32.mrf.mxu0
        %v738 = vadd.f32 0.0, %v737
        %739 = vdwg.mxu0
        %v741 = vrot.slane %v738, 6
        %v743 = vadd.f32 %v415, %v741
        %vm744 = vcmask 1042434
        %v745 = vsel %vm744, %v743, -inf
        %746 = vmax.xlane.f32.xlu0 %v745
        %v747 = vpop.xlane.xlu0 %746
        %vm748 = vcmp.eq.f32.partialorder %v743, %v747
        %v749 = vsel %vm748, %v366, 128
        %v750 = vsel %vm744, %v749, 2147483647
        %v751 = vand.u32 %v750, 65535
        %v752 = vshra.s32 %v750, 16
        %v753 = vcvt.s32.f32 %v751
        %v754 = vcvt.s32.f32 %v752
        %755 = vmin.xlane.f32.xlu0 %v754
        %v756 = vpop.xlane.xlu0 %755
        %vm757 = vcmp.eq.f32.partialorder %v754, %v756
        %v758 = vsel %vm757, %v753, inf
        %759 = vmin.xlane.f32.xlu0 %v758
        %v760 = vpop.xlane.xlu0 %759
        %v761 = vcvt.f32.s32 %v760
        %v762 = vcvt.f32.s32 %v756
        %v763 = vshll.u32 %v762, 16
        %v764 = vadd.s32 %v763, %v761
        %vm765 = vcmp.eq.s32.totalorder %v366, 2
        %v766 = vsel %vm765, %v764, 0
        %v767 = vrot.slane %v766, 3
        %v768 = vadd.s32 %v714, %v767
        %vm769 = vcmp.eq.s32.totalorder %v366, %v764
        %v770 = vsel %vm769, 1.0, 0.0
        %v772 = vrot.slane %v770, 2
        %774 = vmatpush.msra.mxu0 %v362
        %775 = vmatpush.msra.mxu0 %v361
        %776 = vmatpush.msra.mxu0 %v360
        %777 = vmatpush.msra.mxu0 %v359
        %778 = vmatpush.msra.mxu0 %v358
        %779 = vmatpush.msra.mxu0 %v357
        %780 = vmatpush.msra.mxu0 %v356
        %781 = vmatpush.msra.mxu0 %v355
        %782 = vmatpush.msra.mxu0 %v354
        %783 = vmatpush.msra.mxu0 %v353
        %784 = vmatpush.msra.mxu0 %v352
        %785 = vmatpush.msra.mxu0 %v351
        %786 = vmatpush.msra.mxu0 %v350
        %787 = vmatpush.msra.mxu0 %v349
        %788 = vmatpush.msra.mxu0 %v348
        %789 = vmatpush.msra.mxu0 %v347
        %790 = vmatmul.f32.gmra.mxu0 %v772
        %v791 = vpop.f32.mrf.mxu0
        %v792 = vadd.f32 0.0, %v791
        %793 = vdwg.mxu0
        %v795 = vrot.slane %v792, 7
        %v797 = vadd.f32 %v403, %v795
        %vm798 = vcmask 1041409
        %v799 = vsel %vm798, %v797, -inf
        %800 = vmax.xlane.f32.xlu0 %v799
        %v801 = vpop.xlane.xlu0 %800
        %vm802 = vcmp.eq.f32.partialorder %v797, %v801
        %v803 = vsel %vm802, %v366, 128
        %v804 = vsel %vm798, %v803, 2147483647
        %v805 = vand.u32 %v804, 65535
        %v806 = vshra.s32 %v804, 16
        %v807 = vcvt.s32.f32 %v805
        %v808 = vcvt.s32.f32 %v806
        %809 = vmin.xlane.f32.xlu0 %v808
        %v810 = vpop.xlane.xlu0 %809
        %vm811 = vcmp.eq.f32.partialorder %v808, %v810
        %v812 = vsel %vm811, %v807, inf
        %813 = vmin.xlane.f32.xlu0 %v812
        %v814 = vpop.xlane.xlu0 %813
        %v815 = vcvt.f32.s32 %v814
        %v816 = vcvt.f32.s32 %v810
        %v817 = vshll.u32 %v816, 16
        %v818 = vadd.s32 %v817, %v815
        %vm819 = vcmp.eq.s32.totalorder %v366, 1
        %v820 = vsel %vm819, %v818, 0
        %v821 = vrot.slane %v820, 2
        %v822 = vadd.s32 %v768, %v821
        %vm823 = vcmp.eq.s32.totalorder %v366, %v818
        %v824 = vsel %vm823, 1.0, 0.0
        %v826 = vrot.slane %v824, 1
        %828 = vmatpush.msra.mxu0 %v362
        %829 = vmatpush.msra.mxu0 %v361
        %830 = vmatpush.msra.mxu0 %v360
        %831 = vmatpush.msra.mxu0 %v359
        %832 = vmatpush.msra.mxu0 %v358
        %833 = vmatpush.msra.mxu0 %v357
        %834 = vmatpush.msra.mxu0 %v356
        %835 = vmatpush.msra.mxu0 %v355
        %836 = vmatpush.msra.mxu0 %v354
        %837 = vmatpush.msra.mxu0 %v353
        %838 = vmatpush.msra.mxu0 %v352
        %839 = vmatpush.msra.mxu0 %v351
        %840 = vmatpush.msra.mxu0 %v350
        %841 = vmatpush.msra.mxu0 %v349
        %842 = vmatpush.msra.mxu0 %v348
        %843 = vmatpush.msra.mxu0 %v347
        %844 = vmatmul.f32.gmra.mxu0 %v826
        %v845 = vpop.f32.mrf.mxu0
        %v846 = vadd.f32 0.0, %v845
        %847 = vdwg.mxu0
        %v848 = vadd.f32 %v389, %v846
        %vm849 = vcmask 1040384
        %v850 = vsel %vm849, %v848, -inf
        %851 = vmax.xlane.f32.xlu0 %v850
        %v852 = vpop.xlane.xlu0 %851
        %vm853 = vcmp.eq.f32.partialorder %v848, %v852
        %v854 = vsel %vm853, %v366, 128
        %v855 = vsel %vm849, %v854, 2147483647
        %v856 = vand.u32 %v855, 65535
        %v857 = vshra.s32 %v855, 16
        %v858 = vcvt.s32.f32 %v856
        %v859 = vcvt.s32.f32 %v857
        %860 = vmin.xlane.f32.xlu0 %v859
        %v861 = vpop.xlane.xlu0 %860
        %vm862 = vcmp.eq.f32.partialorder %v859, %v861
        %v863 = vsel %vm862, %v858, inf
        %864 = vmin.xlane.f32.xlu0 %v863
        %v865 = vpop.xlane.xlu0 %864
        %v866 = vcvt.f32.s32 %v865
        %v867 = vcvt.f32.s32 %v861
        %v868 = vshll.u32 %v867, 16
        %v869 = vadd.s32 %v868, %v866
        %vm870 = vcmp.eq.s32.totalorder %v366, 0
        %v871 = vsel %vm870, %v869, 0
        %v872 = vrot.slane %v871, 1
        %v873 = vadd.s32 %v822, %v872
        %vm874 = vcmask 64519
        %875 = vst.msk [vmem:[%s329 - $0x7] sm:$0x80] %vm874, %v873
        %s876 = sand.u32 %s164, 1
        %s877 = scalar_lea.sflag [#allocation4], %s876
        %s878 = sand.u32 %s164, 1
        %s879 = scalar_lea.vmem [#allocation11], %s878
        // Predicated region
        $region65: #{tpu_custom_call.1} parent=43 // pred_check
          %p880 = pneg %p174
        $region66: #{tpu_custom_call.1} parent=43 // pred_check_branch
          %882 = sbr.rel (%p880) target = $region68
        $region67: #{tpu_custom_call.1} parent=43 // pred_region
          %884 = vsyncadd %s877, 0
          %s885 = scalar_lea.hbm %s6, %s25
          %s887 = sshll.u32 %s879, 4
          %s888 = int_to_ptr.vmem [resolvable:$true] %s887
          %s889 = sshll.u32 %s885, 4
          %s890 = int_to_ptr.hbm [resolvable:$true] %s889
          %892 = dma.vmem_to_hbm [thread:$0]  %s888, 16, %s890, %s877
        $region68: #{tpu_custom_call.1} parent=43 // pred_fallthru
          _
      $region44: #{tpu_custom_call.1} parent=5 // pred_fallthru
        _
      %p893 = scmp.le.s32.totalorder 2, %s20
      // Predicated region
      $region69: #{tpu_custom_call.1} parent=5 // pred_check
        %p894 = pneg %p893
      $region70: #{tpu_custom_call.1} parent=5 // pred_check_branch
        %896 = sbr.rel (%p894) target = $region72
      $region71: #{tpu_custom_call.1} parent=5 // pred_region
        %s897 = ssub.s32 %s20, 2
        // Predicated region
        $region73: #{tpu_custom_call.1} parent=71 // pred_check
          %p898 = pneg %p180
        $region74: #{tpu_custom_call.1} parent=71 // pred_check_branch
          %900 = sbr.rel (%p898) target = $region76
        $region75: #{tpu_custom_call.1} parent=71 // pred_region
          %s901 = sand.u32 %s165, 1
          %s902 = scalar_lea.sflag [#allocation4], %s901
          %s903 = sand.u32 %s165, 1
          %s904 = scalar_lea.vmem [#allocation11], %s903
          %906 = dma.done %s902, 16
        $region76: #{tpu_custom_call.1} parent=71 // pred_fallthru
          _
      $region72: #{tpu_custom_call.1} parent=5 // pred_fallthru
        _
    $region6: #{tpu_custom_call.1} parent=1 // loop_footer
      %s24 = sadd.s32 1, %s20
    $region7: #{tpu_custom_call.1} parent=1 // loop_footer_branch
      %19 = sbr.rel target = $region3
    $region8: #{tpu_custom_call.1} parent=1 // loop_exit
      _
    %907 = vsyncpa [#allocation3], 1
    %s908 = scalar_lea.sflag [#allocation3], 1
    %909 = vsyncpa %s908, 1
    %910 = vsyncpa [#allocation6], 1
    %911 = vsyncpa [#allocation9], 1
    %912 = vsyncpa [#allocation4], 1
    %s913 = scalar_lea.sflag [#allocation4], 1
    %914 = vsyncpa %s913, 1

</llo_original>
